<compile_context>
chip_gen: v5e
topology: v5e:2x2
jax: 0.10.0
libtpu: 0.0.40
codegen_flags: <defaults>
</compile_context>

<pallas_src>
import functools
import math

import jax
import jax.numpy as jnp
from jax.experimental import pallas as pl
from jax.experimental.pallas import tpu as pltpu

VMEM = pltpu.MemorySpace.VMEM

# VMEM budget handed to every kernel: well under v7x's 64 MiB physical, and raises the
# 16 MiB v5e scoped default so larger tiles still compile there.
VMEM_LIMIT = 32 * 1024 * 1024

# Matmul tile targets (v6e/v7x friendly; on v5e prefer TN=128 for the 4x128^2 MXU).
TM, TN, TK = 256, 256, 512
# Lane-dim block for the pointwise / reduction kernels (~85% of HBM roofline territory).
T_BLOCK = 2048


def _round_up(x, m):
    return ((x + m - 1) // m) * m


# ----------------------------------------------------------------------------
# Kernel 1: tiled matmul + bias + optional ReLU  (Conv1d im2col / ConvT projection /
#           LSTM input projection)
# ----------------------------------------------------------------------------
def _matmul_bias_kernel(x_ref, w_ref, b_ref, o_ref, acc_ref, *, relu):
    @pl.when(pl.program_id(2) == 0)
    def _():
        acc_ref[...] = jnp.zeros_like(acc_ref)

    acc_ref[...] += jnp.dot(x_ref[...], w_ref[...],
                            preferred_element_type=jnp.float32)

    @pl.when(pl.program_id(2) == pl.num_programs(2) - 1)
    def _():
        y = acc_ref[...] + b_ref[...]
        if relu:
            y = jnp.maximum(y, 0.0)
        o_ref[...] = y.astype(o_ref.dtype)


def matmul_bias(x, w, b, relu=False):
    """y = relu?(x @ w + b) with a tiled, double-buffered MXU pipeline."""
    M, K = x.shape
    K2, N = w.shape
    assert K == K2
    # Adaptive tiles: dims smaller than the target become a single full-dim block
    # (legal per the (8,128) rule), larger dims get 8/128-aligned tiles + zero padding.
    tm = _round_up(M, 8) if M <= TM else TM
    tn = N if N <= TN else TN
    tk = K if K <= TK else TK
    Mp, Np, Kp = _round_up(M, tm), _round_up(N, tn), _round_up(K, tk)

    if (Mp, Kp) != (M, K):
        x = jnp.pad(x, ((0, Mp - M), (0, Kp - K)))
    if (Kp, Np) != (K, N):
        w = jnp.pad(w, ((0, Kp - K), (0, Np - N)))
    b2 = b.reshape(1, N).astype(jnp.float32)
    if Np != N:
        b2 = jnp.pad(b2, ((0, 0), (0, Np - N)))

    grid = (Mp // tm, Np // tn, Kp // tk)
    # TODO(synk): cast x/w to bf16 (keep f32 accumulate) on v6e/v7x once shapes are
    # MXU-bound; kept f32 here for bit-stable small-model numerics.
    out = pl.pallas_call(
        functools.partial(_matmul_bias_kernel, relu=relu),
        out_shape=jax.ShapeDtypeStruct((Mp, Np), jnp.float32),
        grid=grid,
        in_specs=[
            pl.BlockSpec((tm, tk), lambda i, j, k: (i, k)),
            pl.BlockSpec((tk, tn), lambda i, j, k: (k, j)),
            pl.BlockSpec((1, tn), lambda i, j, k: (0, j)),
        ],
        out_specs=pl.BlockSpec((tm, tn), lambda i, j, k: (i, j)),
        scratch_shapes=[pltpu.VMEM((tm, tn), jnp.float32)],
        compiler_params=pltpu.CompilerParams(
            dimension_semantics=("parallel", "parallel", "arbitrary"),
            vmem_limit_bytes=VMEM_LIMIT),
    )(x, w, b2)
    if (Mp, Np) != (M, N):
        out = out[:M, :N]
    return out


# ----------------------------------------------------------------------------
# Kernel 2: per-batch std of the channel-mean signal (T-tiled blocked reduction)
# ----------------------------------------------------------------------------
def _stats_kernel(mix_ref, std_ref, sum_ref, sq_ref, *, n_time, n_chan):
    j = pl.program_id(0)

    @pl.when(j == 0)
    def _():
        sum_ref[...] = jnp.zeros_like(sum_ref)
        sq_ref[...] = jnp.zeros_like(sq_ref)

    mono = jnp.sum(mix_ref[...], axis=1) * (1.0 / n_chan)          # (B, Tblk)
    sum_ref[...] += jnp.sum(mono, axis=-1, keepdims=True)
    sq_ref[...] += jnp.sum(mono * mono, axis=-1, keepdims=True)

    @pl.when(j == pl.num_programs(0) - 1)
    def _():
        s = sum_ref[...]
        mean = s * (1.0 / n_time)
        # Unbiased (Bessel) variance like torch.std; denominator guarded for T == 1.
        var = (sq_ref[...] - s * mean) * (1.0 / max(n_time - 1, 1))
        std_ref[...] = jnp.sqrt(jnp.maximum(var, 0.0)).astype(std_ref.dtype)


def mono_std(mix):
    B, C, T = mix.shape
    if T <= T_BLOCK:
        tb, Tp = T, T
    else:
        tb = T_BLOCK
        Tp = _round_up(T, tb)
        mix = jnp.pad(mix, ((0, 0), (0, 0), (0, Tp - T)))          # zeros don't affect sums
    std = pl.pallas_call(
        functools.partial(_stats_kernel, n_time=T, n_chan=C),
        out_shape=jax.ShapeDtypeStruct((B, 1), jnp.float32),
        grid=(Tp // tb,),
        in_specs=[pl.BlockSpec((B, C, tb), lambda j: (0, 0, j))],
        out_specs=pl.BlockSpec((B, 1), lambda j: (0, 0)),
        scratch_shapes=[pltpu.VMEM((B, 1), jnp.float32),
                        pltpu.VMEM((B, 1), jnp.float32)],
        compiler_params=pltpu.CompilerParams(
            dimension_semantics=("arbitrary",),
            vmem_limit_bytes=VMEM_LIMIT),
    )(mix)
    return std.reshape(B, 1, 1)


# ----------------------------------------------------------------------------
# Kernel 3: pointwise (x + bias) -> ReLU? -> * scale, T-tiled (lane-dense blocks)
# ----------------------------------------------------------------------------
def _bias_act_scale_kernel(*refs, relu, use_bias, use_scale):
    x_ref, o_ref = refs[0], refs[-1]
    idx = 1
    y = x_ref[...]
    if use_bias:
        y = y + refs[idx][...]          # (B,C,Tb) + (1,C,1)
        idx += 1
    if relu:
        y = jnp.maximum(y, 0.0)
    if use_scale:
        y = y * refs[idx][...]          # * (B,1,1)
    o_ref[...] = y.astype(o_ref.dtype)


def bias_act_scale(x, bias=None, scale=None, relu=False):
    B, C, T = x.shape
    if T <= T_BLOCK:
        tb, Tp = T, T
    else:
        tb = T_BLOCK
        Tp = _round_up(T, tb)
        x = jnp.pad(x, ((0, 0), (0, 0), (0, Tp - T)))
    inputs = [x]
    in_specs = [pl.BlockSpec((B, C, tb), lambda j: (0, 0, j))]
    if bias is not None:
        inputs.append(bias.reshape(1, C, 1).astype(jnp.float32))
        in_specs.append(pl.BlockSpec((1, C, 1), lambda j: (0, 0, 0)))
    if scale is not None:
        inputs.append(scale.reshape(B, 1, 1).astype(jnp.float32))
        in_specs.append(pl.BlockSpec((B, 1, 1), lambda j: (0, 0, 0)))
    out = pl.pallas_call(
        functools.partial(_bias_act_scale_kernel, relu=relu,
                          use_bias=bias is not None, use_scale=scale is not None),
        out_shape=jax.ShapeDtypeStruct((B, C, Tp), x.dtype),
        grid=(Tp // tb,),
        in_specs=in_specs,
        out_specs=pl.BlockSpec((B, C, tb), lambda j: (0, 0, j)),
        compiler_params=pltpu.CompilerParams(
            dimension_semantics=("parallel",),
            vmem_limit_bytes=VMEM_LIMIT),
    )(*inputs)
    return out[:, :, :T] if Tp != T else out


# ----------------------------------------------------------------------------
# Kernel 4: unidirectional LSTM recurrence (fused 4H-wide gates, fori_loop over T)
# ----------------------------------------------------------------------------
def _lstm_rec_kernel(xp_ref, whh_ref, y_ref, *, hidden):
    T, B, _ = xp_ref.shape
    H = hidden
    whh = whh_ref[...]                                   # (H, 4H), hoisted load

    def step(t, carry):
        h, c = carry
        # One lane-dense (B, 4H) gate tensor: precomputed x-projection + h @ Whh.
        g = xp_ref[t] + jnp.dot(h, whh, preferred_element_type=jnp.float32)
        i = jax.nn.sigmoid(g[:, 0 * H:1 * H])
        f = jax.nn.sigmoid(g[:, 1 * H:2 * H])
        gc = jnp.tanh(g[:, 2 * H:3 * H])
        o = jax.nn.sigmoid(g[:, 3 * H:4 * H])
        c = f * c + i * gc
        h = o * jnp.tanh(c)
        y_ref[t] = h.astype(y_ref.dtype)
        return (h, c)

    h0 = jnp.zeros((B, H), jnp.float32)
    c0 = jnp.zeros((B, H), jnp.float32)
    jax.lax.fori_loop(0, T, step, (h0, c0))


def lstm_layer(x, wih, whh, bias, hidden):
    """One LSTM layer. x: (T, B, D); wih: (D, 4H); whh: (H, 4H); bias: (4H,) = b_ih + b_hh.

    The input projection for ALL timesteps runs as one big tiled matmul (MXU-friendly);
    only h @ Whh + elementwise gate math stays on the serial critical path.
    """
    T, B, D = x.shape
    xproj = matmul_bias(x.reshape(T * B, D), wih, bias, relu=False)     # (T*B, 4H)
    xproj = xproj.reshape(T, B, 4 * hidden)
    # TODO(synk): for very large hidden sizes / sequence lengths, stream Whh / xproj
    # from HBM with a manual double buffer instead of whole-array VMEM residency.
    return pl.pallas_call(
        functools.partial(_lstm_rec_kernel, hidden=hidden),
        out_shape=jax.ShapeDtypeStruct((T, B, hidden), jnp.float32),
        in_specs=[pl.BlockSpec(memory_space=VMEM),
                  pl.BlockSpec(memory_space=VMEM)],
        out_specs=pl.BlockSpec(memory_space=VMEM),
        compiler_params=pltpu.CompilerParams(vmem_limit_bytes=VMEM_LIMIT),
    )(xproj, whh)


# ----------------------------------------------------------------------------
# Conv wrappers (glue in JAX, matmul / pointwise in Pallas)
# ----------------------------------------------------------------------------
def conv1d_relu(x, w, b, stride):
    # x: (B, Cin, T); w: (Cout, Cin, K) [torch Conv1d layout]; b: (Cout,)
    B, Cin, T = x.shape
    Cout, _, K = w.shape
    T_out = (T - K) // stride + 1
    # im2col via K strided slices (glue).
    # TODO(synk): fuse the windowed gather into the matmul kernel with overlapping-window
    # DMA to remove the (K/stride)x patch blowup for long inputs.
    cols = [jax.lax.slice(x, (0, 0, k), (B, Cin, k + (T_out - 1) * stride + 1),
                          (1, 1, stride)) for k in range(K)]
    patches = jnp.stack(cols, axis=-1)                                   # (B, Cin, T_out, K)
    patches = patches.transpose(0, 2, 1, 3).reshape(B * T_out, Cin * K)
    w2 = w.reshape(Cout, Cin * K).T                                      # (Cin*K, Cout)
    y = matmul_bias(patches, w2, b, relu=True)                           # (B*T_out, Cout)
    return y.reshape(B, T_out, Cout).transpose(0, 2, 1)                  # (B, Cout, T_out)


def conv_transpose1d(x, w, b, stride, relu, scale=None):
    # x: (B, Cin, T_in); w: (Cin, Cout, K) [torch ConvTranspose1d layout]; b: (Cout,)
    B, Cin, T_in = x.shape
    _, Cout, K = w.shape
    T_out = (T_in - 1) * stride + K
    xt = x.transpose(0, 2, 1).reshape(B * T_in, Cin)
    w2 = w.reshape(Cin, Cout * K)
    proj = matmul_bias(xt, w2, jnp.zeros((Cout * K,), jnp.float32), relu=False)
    proj = proj.reshape(B, T_in, Cout, K)

    # Overlap-add via ceil(K/stride) shifted contiguous slabs (replaces the K-step
    # strided-scatter read-modify-write loop -> ~K/ceil(K/stride)x less HBM traffic).
    L = T_in * stride
    groups = -(-K // stride)
    acc = None
    for g in range(groups):
        width = min(stride, K - g * stride)
        sub = proj[:, :, :, g * stride:g * stride + width]               # (B,T_in,Cout,width)
        if width < stride:
            sub = jnp.pad(sub, ((0, 0), (0, 0), (0, 0), (0, stride - width)))
        slab = sub.transpose(0, 2, 1, 3).reshape(B, Cout, L)             # (B,Cout,T_in*stride)
        off = g * stride
        keep = min(L, T_out - off)
        slab = slab[:, :, :keep]
        slab = jnp.pad(slab, ((0, 0), (0, 0), (off, T_out - off - keep)))
        acc = slab if acc is None else acc + slab

    # Bias + optional ReLU + optional per-batch std rescale fused in one pointwise pass
    # (scale multiply skipped entirely when scale is None).
    return bias_act_scale(acc, bias=b, scale=scale, relu=relu)


# ----------------------------------------------------------------------------
# Model
# ----------------------------------------------------------------------------
def _uniform(key, shape, fan):
    bound = 1.0 / math.sqrt(fan)
    return jax.random.uniform(key, shape, jnp.float32, -bound, bound)


class SimpleModelLSTMPallas:
    def __init__(self, key, chin=1, chout=1, depth=2, kernel_size=8, stride=4,
                 causal=True, hidden=16, growth=2, max_hidden=4096,
                 normalize=True, resample=1, floor=1e-3):
        assert causal, "only the causal (unidirectional LSTM) path is implemented"
        # TODO(synk): bidirectional BLSTM + Linear branch (causal=False) not implemented.
        self.depth = depth
        self.kernel_size = kernel_size
        self.stride = stride
        self.normalize = normalize
        self.resample = resample
        self.floor = floor

        enc, dec = [], []
        ci, co, hid = chin, chout, hidden
        for index in range(depth):
            k1, k2, k3, k4, key = jax.random.split(key, 5)
            enc.append((_uniform(k1, (hid, ci, kernel_size), ci * kernel_size),
                        _uniform(k2, (hid,), ci * kernel_size)))
            dec.insert(0, (_uniform(k3, (hid, co, kernel_size), hid * kernel_size),
                           _uniform(k4, (co,), hid * kernel_size),
                           index > 0))
            ci, co = hid, hid
            hid = min(int(growth * hid), max_hidden)
        self.enc_params = enc
        self.dec_params = dec

        d = ci                          # LSTM width (input size == hidden size)
        self.lstm_dim = d
        lstm = []
        for _ in range(2):              # num_layers = 2
            k1, k2, k3, k4, key = jax.random.split(key, 5)
            wih = _uniform(k1, (d, 4 * d), d)       # fused (i, f, g, o) gates, last dim
            whh = _uniform(k2, (d, 4 * d), d)
            bias = _uniform(k3, (4 * d,), d) + _uniform(k4, (4 * d,), d)   # b_ih + b_hh
            lstm.append((wih, whh, bias))
        self.lstm_params = lstm

    def valid_length(self, length):
        length = math.ceil(length * self.resample)
        for _ in range(self.depth):
            length = math.ceil((length - self.kernel_size) / self.stride) + 1
            length = max(length, 1)
        for _ in range(self.depth):
            length = (length - 1) * self.stride + self.kernel_size
        return int(math.ceil(length / self.resample))

    def forward(self, mix):
        if mix.ndim == 2:
            mix = mix[:, None, :]                                   # (B, 1, T)
        B, _, T = mix.shape
        if self.normalize:
            std = mono_std(mix)                                     # (B, 1, 1)
            inv = 1.0 / (self.floor + std)                          # tiny JAX op
            mix = bias_act_scale(mix, bias=None, scale=inv, relu=False)
        else:
            std = None
        length = T
        pad = self.valid_length(length) - length
        x = jnp.pad(mix, ((0, 0), (0, 0), (0, pad)))

        for w, b in self.enc_params:
            x = conv1d_relu(x, w, b, self.stride)                   # (B, C, T')

        x = x.transpose(2, 0, 1)                                    # (T', B, C)
        for wih, whh, bias in self.lstm_params:
            x = lstm_layer(x, wih, whh, bias, self.lstm_dim)
        x = x.transpose(1, 2, 0)                                    # (B, C, T')

        n_dec = len(self.dec_params)
        for li, (w, b, relu) in enumerate(self.dec_params):
            fuse_std = std if (li == n_dec - 1) else None           # fold std * x in
            x = conv_transpose1d(x, w, b, self.stride, relu=relu, scale=fuse_std)

        return x[..., :length]


if __name__ == "__main__":
    key = jax.random.PRNGKey(0)
    k_params, k_x = jax.random.split(key)
    model = SimpleModelLSTMPallas(k_params, chin=1, chout=1, depth=2,
                                  kernel_size=8, stride=4, causal=True,
                                  hidden=16, growth=2, normalize=True)
    x = jax.random.normal(k_x, (2, 64), jnp.float32)   # (batch, time) -> (2, 1, 64)
    fwd = jax.jit(model.forward)
    out = fwd(x)
    jax.block_until_ready(out)
    assert out.shape == (2, 1, 64), out.shape
    assert bool(jnp.all(jnp.isfinite(out)))
    print("KERNEL_OK")
</pallas_src>

<mosaic_0001>
module attributes {stable_mosaic.version = 11 : i64} {
  func.func @_stats_kernel(%arg0: i32, %arg1: memref<2x1x64xf32, #tpu.memory_space<vmem>>, %arg2: memref<2x1xf32, #tpu.memory_space<vmem>>, %arg3: memref<2x1xf32, #tpu.memory_space<vmem>>, %arg4: memref<2x1xf32, #tpu.memory_space<vmem>>) attributes {dimension_semantics = [#tpu.dimension_semantics<arbitrary>], iteration_bounds = array<i64: 1>, scalar_prefetch = 0 : i64, scratch_operands = 2 : i64, tpu.core_type = #tpu.core_type<tc>, window_params = [{transform_indices = @transform_0, window_bounds = array<i64: 2, 1, 64>}, {pipeline_mode = #tpu.pipeline_mode<synchronous>, transform_indices = @transform_1, window_bounds = array<i64: 2, 1>}]} {
    %c0_i32 = arith.constant 0 : i32
    %0 = arith.cmpi eq, %arg0, %c0_i32 : i32
    %1 = arith.extui %0 : i1 to i32
    %c0_i32_0 = arith.constant 0 : i32
    %2 = arith.cmpi ne, %1, %c0_i32_0 : i32
    scf.if %2 {
      %cst_16 = arith.constant 0.000000e+00 : f32
      %21 = vector.broadcast %cst_16 : f32 to vector<2x1xf32>
      %c0_17 = arith.constant 0 : index
      %c0_18 = arith.constant 0 : index
      %22 = vector.load %arg3[%c0_17, %c0_18] : memref<2x1xf32, #tpu.memory_space<vmem>>, vector<2x1xf32>
      tpu.vector_store %arg3[%c0_17, %c0_18], %21 {strides = array<i32>} : memref<2x1xf32, #tpu.memory_space<vmem>>, vector<2x1xf32>,
      %cst_19 = arith.constant 0.000000e+00 : f32
      %23 = vector.broadcast %cst_19 : f32 to vector<2x1xf32>
      %c0_20 = arith.constant 0 : index
      %c0_21 = arith.constant 0 : index
      %24 = vector.load %arg4[%c0_20, %c0_21] : memref<2x1xf32, #tpu.memory_space<vmem>>, vector<2x1xf32>
      tpu.vector_store %arg4[%c0_20, %c0_21], %23 {strides = array<i32>} : memref<2x1xf32, #tpu.memory_space<vmem>>, vector<2x1xf32>,
    } else {
    }
    %c0 = arith.constant 0 : index
    %c0_1 = arith.constant 0 : index
    %c0_2 = arith.constant 0 : index
    %3 = vector.load %arg1[%c0, %c0_1, %c0_2] : memref<2x1x64xf32, #tpu.memory_space<vmem>>, vector<2x1x64xf32>
    %cst = arith.constant dense<0.000000e+00> : vector<2x64xf32>
    %4 = vector.multi_reduction <add>, %3, %cst [1] : vector<2x1x64xf32> to vector<2x64xf32>
    %cst_3 = arith.constant 1.000000e+00 : f32
    %5 = vector.broadcast %cst_3 : f32 to vector<2x64xf32>
    %6 = arith.mulf %4, %5 : vector<2x64xf32>
    %c0_4 = arith.constant 0 : index
    %c0_5 = arith.constant 0 : index
    %7 = vector.load %arg3[%c0_4, %c0_5] : memref<2x1xf32, #tpu.memory_space<vmem>>, vector<2x1xf32>
    %cst_6 = arith.constant dense<0.000000e+00> : vector<2xf32>
    %8 = vector.multi_reduction <add>, %6, %cst_6 [1] : vector<2x64xf32> to vector<2xf32>
    %9 = vector.shape_cast %8 : vector<2xf32> to vector<2x1xf32>
    %10 = arith.addf %7, %9 : vector<2x1xf32>
    %c0_7 = arith.constant 0 : index
    %c0_8 = arith.constant 0 : index
    %11 = vector.load %arg3[%c0_7, %c0_8] : memref<2x1xf32, #tpu.memory_space<vmem>>, vector<2x1xf32>
    tpu.vector_store %arg3[%c0_7, %c0_8], %10 {strides = array<i32>} : memref<2x1xf32, #tpu.memory_space<vmem>>, vector<2x1xf32>,
    %c0_9 = arith.constant 0 : index
    %c0_10 = arith.constant 0 : index
    %12 = vector.load %arg4[%c0_9, %c0_10] : memref<2x1xf32, #tpu.memory_space<vmem>>, vector<2x1xf32>
    %13 = arith.mulf %6, %6 : vector<2x64xf32>
    %cst_11 = arith.constant dense<0.000000e+00> : vector<2xf32>
    %14 = vector.multi_reduction <add>, %13, %cst_11 [1] : vector<2x64xf32> to vector<2xf32>
    %15 = vector.shape_cast %14 : vector<2xf32> to vector<2x1xf32>
    %16 = arith.addf %12, %15 : vector<2x1xf32>
    %c0_12 = arith.constant 0 : index
    %c0_13 = arith.constant 0 : index
    %17 = vector.load %arg4[%c0_12, %c0_13] : memref<2x1xf32, #tpu.memory_space<vmem>>, vector<2x1xf32>
    tpu.vector_store %arg4[%c0_12, %c0_13], %16 {strides = array<i32>} : memref<2x1xf32, #tpu.memory_space<vmem>>, vector<2x1xf32>,
    %c0_i32_14 = arith.constant 0 : i32
    %18 = arith.cmpi eq, %arg0, %c0_i32_14 : i32
    %19 = arith.extui %18 : i1 to i32
    %c0_i32_15 = arith.constant 0 : i32
    %20 = arith.cmpi ne, %19, %c0_i32_15 : i32
    scf.if %20 {
      %c0_16 = arith.constant 0 : index
      %c0_17 = arith.constant 0 : index
      %21 = vector.load %arg3[%c0_16, %c0_17] : memref<2x1xf32, #tpu.memory_space<vmem>>, vector<2x1xf32>
      %cst_18 = arith.constant 1.562500e-02 : f32
      %22 = vector.broadcast %cst_18 : f32 to vector<2x1xf32>
      %23 = arith.mulf %21, %22 : vector<2x1xf32>
      %c0_19 = arith.constant 0 : index
      %c0_20 = arith.constant 0 : index
      %24 = vector.load %arg4[%c0_19, %c0_20] : memref<2x1xf32, #tpu.memory_space<vmem>>, vector<2x1xf32>
      %25 = arith.mulf %21, %23 : vector<2x1xf32>
      %26 = arith.subf %24, %25 : vector<2x1xf32>
      %cst_21 = arith.constant 0.0158730168 : f32
      %27 = vector.broadcast %cst_21 : f32 to vector<2x1xf32>
      %28 = arith.mulf %26, %27 : vector<2x1xf32>
      %cst_22 = arith.constant 0.000000e+00 : f32
      %29 = vector.broadcast %cst_22 : f32 to vector<2x1xf32>
      %30 = arith.maximumf %28, %29 : vector<2x1xf32>
      %31 = math.sqrt %30 : vector<2x1xf32>
      %c0_23 = arith.constant 0 : index
      %c0_24 = arith.constant 0 : index
      %32 = vector.load %arg2[%c0_23, %c0_24] : memref<2x1xf32, #tpu.memory_space<vmem>>, vector<2x1xf32>
      tpu.vector_store %arg2[%c0_23, %c0_24], %31 {strides = array<i32>} : memref<2x1xf32, #tpu.memory_space<vmem>>, vector<2x1xf32>,
    } else {
    }
    return
  }
  func.func @transform_0(%arg0: i32) -> (i32, i32, i32) {
    %c0_i32 = arith.constant 0 : i32
    %c0_i32_0 = arith.constant 0 : i32
    %c0_i32_1 = arith.constant 0 : i32
    return %c0_i32, %c0_i32_0, %arg0 : i32, i32, i32
  }
  func.func @transform_1(%arg0: i32) -> (i32, i32) {
    %c0_i32 = arith.constant 0 : i32
    %c0_i32_0 = arith.constant 0 : i32
    %c0_i32_1 = arith.constant 0 : i32
    return %c0_i32, %c0_i32_0 : i32, i32
  }
}

module attributes {stable_mosaic.version = 11 : i64} {
  func.func @_bias_act_scale_kernel(%arg0: i32, %arg1: memref<2x1x64xf32, #tpu.memory_space<vmem>>, %arg2: memref<2x1x1xf32, #tpu.memory_space<vmem>>, %arg3: memref<2x1x64xf32, #tpu.memory_space<vmem>>) attributes {dimension_semantics = [#tpu.dimension_semantics<parallel>], iteration_bounds = array<i64: 1>, scalar_prefetch = 0 : i64, scratch_operands = 0 : i64, tpu.core_type = #tpu.core_type<tc>, window_params = [{transform_indices = @transform_0, window_bounds = array<i64: 2, 1, 64>}, {pipeline_mode = #tpu.pipeline_mode<synchronous>, transform_indices = @transform_1, window_bounds = array<i64: 2, 1, 1>}, {transform_indices = @transform_2, window_bounds = array<i64: 2, 1, 64>}]} {
    %c0 = arith.constant 0 : index
    %c0_0 = arith.constant 0 : index
    %c0_1 = arith.constant 0 : index
    %0 = vector.load %arg1[%c0, %c0_0, %c0_1] : memref<2x1x64xf32, #tpu.memory_space<vmem>>, vector<2x1x64xf32>
    %c0_2 = arith.constant 0 : index
    %c0_3 = arith.constant 0 : index
    %c0_4 = arith.constant 0 : index
    %1 = vector.load %arg2[%c0_2, %c0_3, %c0_4] : memref<2x1x1xf32, #tpu.memory_space<vmem>>, vector<2x1x1xf32>
    %2 = vector.broadcast %1 : vector<2x1x1xf32> to vector<2x1x64xf32>
    %3 = arith.mulf %0, %2 : vector<2x1x64xf32>
    %c0_5 = arith.constant 0 : index
    %c0_6 = arith.constant 0 : index
    %c0_7 = arith.constant 0 : index
    %4 = vector.load %arg3[%c0_5, %c0_6, %c0_7] : memref<2x1x64xf32, #tpu.memory_space<vmem>>, vector<2x1x64xf32>
    tpu.vector_store %arg3[%c0_5, %c0_6, %c0_7], %3 {strides = array<i32>} : memref<2x1x64xf32, #tpu.memory_space<vmem>>, vector<2x1x64xf32>,
    return
  }
  func.func @transform_0(%arg0: i32) -> (i32, i32, i32) {
    %c0_i32 = arith.constant 0 : i32
    %c0_i32_0 = arith.constant 0 : i32
    %c0_i32_1 = arith.constant 0 : i32
    return %c0_i32, %c0_i32_0, %arg0 : i32, i32, i32
  }
  func.func @transform_1(%arg0: i32) -> (i32, i32, i32) {
    %c0_i32 = arith.constant 0 : i32
    %c0_i32_0 = arith.constant 0 : i32
    %c0_i32_1 = arith.constant 0 : i32
    %c0_i32_2 = arith.constant 0 : i32
    return %c0_i32, %c0_i32_0, %c0_i32_1 : i32, i32, i32
  }
  func.func @transform_2(%arg0: i32) -> (i32, i32, i32) {
    %c0_i32 = arith.constant 0 : i32
    %c0_i32_0 = arith.constant 0 : i32
    %c0_i32_1 = arith.constant 0 : i32
    return %c0_i32, %c0_i32_0, %arg0 : i32, i32, i32
  }
}

module attributes {stable_mosaic.version = 11 : i64} {
  func.func @_matmul_bias_kernel(%arg0: i32, %arg1: i32, %arg2: i32, %arg3: memref<32x8xf32, #tpu.memory_space<vmem>>, %arg4: memref<8x16xf32, #tpu.memory_space<vmem>>, %arg5: memref<1x16xf32, #tpu.memory_space<vmem>>, %arg6: memref<32x16xf32, #tpu.memory_space<vmem>>, %arg7: memref<32x16xf32, #tpu.memory_space<vmem>>) attributes {dimension_semantics = [#tpu.dimension_semantics<parallel>, #tpu.dimension_semantics<parallel>, #tpu.dimension_semantics<arbitrary>], iteration_bounds = array<i64: 1, 1, 1>, scalar_prefetch = 0 : i64, scratch_operands = 1 : i64, tpu.core_type = #tpu.core_type<tc>, window_params = [{transform_indices = @transform_0, window_bounds = array<i64: 32, 8>}, {transform_indices = @transform_1, window_bounds = array<i64: 8, 16>}, {transform_indices = @transform_2, window_bounds = array<i64: 1, 16>}, {transform_indices = @transform_3, window_bounds = array<i64: 32, 16>}]} {
    %c0_i32 = arith.constant 0 : i32
    %0 = arith.cmpi eq, %arg2, %c0_i32 : i32
    %1 = arith.extui %0 : i1 to i32
    %c0_i32_0 = arith.constant 0 : i32
    %2 = arith.cmpi ne, %1, %c0_i32_0 : i32
    scf.if %2 {
      %cst_10 = arith.constant 0.000000e+00 : f32
      %12 = vector.broadcast %cst_10 : f32 to vector<32x16xf32>
      %c0_11 = arith.constant 0 : index
      %c0_12 = arith.constant 0 : index
      %13 = vector.load %arg7[%c0_11, %c0_12] : memref<32x16xf32, #tpu.memory_space<vmem>>, vector<32x16xf32>
      tpu.vector_store %arg7[%c0_11, %c0_12], %12 {strides = array<i32>} : memref<32x16xf32, #tpu.memory_space<vmem>>, vector<32x16xf32>,
    } else {
    }
    %c0 = arith.constant 0 : index
    %c0_1 = arith.constant 0 : index
    %3 = vector.load %arg7[%c0, %c0_1] : memref<32x16xf32, #tpu.memory_space<vmem>>, vector<32x16xf32>
    %c0_2 = arith.constant 0 : index
    %c0_3 = arith.constant 0 : index
    %4 = vector.load %arg3[%c0_2, %c0_3] : memref<32x8xf32, #tpu.memory_space<vmem>>, vector<32x8xf32>
    %c0_4 = arith.constant 0 : index
    %c0_5 = arith.constant 0 : index
    %5 = vector.load %arg4[%c0_4, %c0_5] : memref<8x16xf32, #tpu.memory_space<vmem>>, vector<8x16xf32>
    %cst = arith.constant dense<0.000000e+00> : vector<32x16xf32>
    %6 = tpu.matmul %4, %5, %cst {dimension_numbers = #tpu.dot_dimension_numbers<[1], [0], [0], [1], [0, 0, 1, 1], [], []>} : vector<32x8xf32>, vector<8x16xf32>, vector<32x16xf32> -> vector<32x16xf32>
    %7 = arith.addf %3, %6 : vector<32x16xf32>
    %c0_6 = arith.constant 0 : index
    %c0_7 = arith.constant 0 : index
    %8 = vector.load %arg7[%c0_6, %c0_7] : memref<32x16xf32, #tpu.memory_space<vmem>>, vector<32x16xf32>
    tpu.vector_store %arg7[%c0_6, %c0_7], %7 {strides = array<i32>} : memref<32x16xf32, #tpu.memory_space<vmem>>, vector<32x16xf32>,
    %c0_i32_8 = arith.constant 0 : i32
    %9 = arith.cmpi eq, %arg2, %c0_i32_8 : i32
    %10 = arith.extui %9 : i1 to i32
    %c0_i32_9 = arith.constant 0 : i32
    %11 = arith.cmpi ne, %10, %c0_i32_9 : i32
    scf.if %11 {
      %c0_10 = arith.constant 0 : index
      %c0_11 = arith.constant 0 : index
      %12 = vector.load %arg7[%c0_10, %c0_11] : memref<32x16xf32, #tpu.memory_space<vmem>>, vector<32x16xf32>
      %c0_12 = arith.constant 0 : index
      %c0_13 = arith.constant 0 : index
      %13 = vector.load %arg5[%c0_12, %c0_13] : memref<1x16xf32, #tpu.memory_space<vmem>>, vector<1x16xf32>
      %14 = vector.broadcast %13 : vector<1x16xf32> to vector<32x16xf32>
      %15 = arith.addf %12, %14 : vector<32x16xf32>
      %cst_14 = arith.constant 0.000000e+00 : f32
      %16 = vector.broadcast %cst_14 : f32 to vector<32x16xf32>
      %17 = arith.maximumf %15, %16 : vector<32x16xf32>
      %c0_15 = arith.constant 0 : index
      %c0_16 = arith.constant 0 : index
      %18 = vector.load %arg6[%c0_15, %c0_16] : memref<32x16xf32, #tpu.memory_space<vmem>>, vector<32x16xf32>
      tpu.vector_store %arg6[%c0_15, %c0_16], %17 {strides = array<i32>} : memref<32x16xf32, #tpu.memory_space<vmem>>, vector<32x16xf32>,
    } else {
    }
    return
  }
  func.func @transform_0(%arg0: i32, %arg1: i32, %arg2: i32) -> (i32, i32) {
    %c0_i32 = arith.constant 0 : i32
    return %arg0, %arg2 : i32, i32
  }
  func.func @transform_1(%arg0: i32, %arg1: i32, %arg2: i32) -> (i32, i32) {
    %c0_i32 = arith.constant 0 : i32
    return %arg2, %arg1 : i32, i32
  }
  func.func @transform_2(%arg0: i32, %arg1: i32, %arg2: i32) -> (i32, i32) {
    %c0_i32 = arith.constant 0 : i32
    %c0_i32_0 = arith.constant 0 : i32
    return %c0_i32, %arg1 : i32, i32
  }
  func.func @transform_3(%arg0: i32, %arg1: i32, %arg2: i32) -> (i32, i32) {
    %c0_i32 = arith.constant 0 : i32
    return %arg0, %arg1 : i32, i32
  }
}

module attributes {stable_mosaic.version = 11 : i64} {
  func.func @_matmul_bias_kernel(%arg0: i32, %arg1: i32, %arg2: i32, %arg3: memref<8x128xf32, #tpu.memory_space<vmem>>, %arg4: memref<128x32xf32, #tpu.memory_space<vmem>>, %arg5: memref<1x32xf32, #tpu.memory_space<vmem>>, %arg6: memref<8x32xf32, #tpu.memory_space<vmem>>, %arg7: memref<8x32xf32, #tpu.memory_space<vmem>>) attributes {dimension_semantics = [#tpu.dimension_semantics<parallel>, #tpu.dimension_semantics<parallel>, #tpu.dimension_semantics<arbitrary>], iteration_bounds = array<i64: 1, 1, 1>, scalar_prefetch = 0 : i64, scratch_operands = 1 : i64, tpu.core_type = #tpu.core_type<tc>, window_params = [{transform_indices = @transform_0, window_bounds = array<i64: 8, 128>}, {transform_indices = @transform_1, window_bounds = array<i64: 128, 32>}, {transform_indices = @transform_2, window_bounds = array<i64: 1, 32>}, {transform_indices = @transform_3, window_bounds = array<i64: 8, 32>}]} {
    %c0_i32 = arith.constant 0 : i32
    %0 = arith.cmpi eq, %arg2, %c0_i32 : i32
    %1 = arith.extui %0 : i1 to i32
    %c0_i32_0 = arith.constant 0 : i32
    %2 = arith.cmpi ne, %1, %c0_i32_0 : i32
    scf.if %2 {
      %cst_10 = arith.constant 0.000000e+00 : f32
      %12 = vector.broadcast %cst_10 : f32 to vector<8x32xf32>
      %c0_11 = arith.constant 0 : index
      %c0_12 = arith.constant 0 : index
      %13 = vector.load %arg7[%c0_11, %c0_12] : memref<8x32xf32, #tpu.memory_space<vmem>>, vector<8x32xf32>
      tpu.vector_store %arg7[%c0_11, %c0_12], %12 {strides = array<i32>} : memref<8x32xf32, #tpu.memory_space<vmem>>, vector<8x32xf32>,
    } else {
    }
    %c0 = arith.constant 0 : index
    %c0_1 = arith.constant 0 : index
    %3 = vector.load %arg7[%c0, %c0_1] : memref<8x32xf32, #tpu.memory_space<vmem>>, vector<8x32xf32>
    %c0_2 = arith.constant 0 : index
    %c0_3 = arith.constant 0 : index
    %4 = vector.load %arg3[%c0_2, %c0_3] : memref<8x128xf32, #tpu.memory_space<vmem>>, vector<8x128xf32>
    %c0_4 = arith.constant 0 : index
    %c0_5 = arith.constant 0 : index
    %5 = vector.load %arg4[%c0_4, %c0_5] : memref<128x32xf32, #tpu.memory_space<vmem>>, vector<128x32xf32>
    %cst = arith.constant dense<0.000000e+00> : vector<8x32xf32>
    %6 = tpu.matmul %4, %5, %cst {dimension_numbers = #tpu.dot_dimension_numbers<[1], [0], [0], [1], [0, 0, 1, 1], [], []>} : vector<8x128xf32>, vector<128x32xf32>, vector<8x32xf32> -> vector<8x32xf32>
    %7 = arith.addf %3, %6 : vector<8x32xf32>
    %c0_6 = arith.constant 0 : index
    %c0_7 = arith.constant 0 : index
    %8 = vector.load %arg7[%c0_6, %c0_7] : memref<8x32xf32, #tpu.memory_space<vmem>>, vector<8x32xf32>
    tpu.vector_store %arg7[%c0_6, %c0_7], %7 {strides = array<i32>} : memref<8x32xf32, #tpu.memory_space<vmem>>, vector<8x32xf32>,
    %c0_i32_8 = arith.constant 0 : i32
    %9 = arith.cmpi eq, %arg2, %c0_i32_8 : i32
    %10 = arith.extui %9 : i1 to i32
    %c0_i32_9 = arith.constant 0 : i32
    %11 = arith.cmpi ne, %10, %c0_i32_9 : i32
    scf.if %11 {
      %c0_10 = arith.constant 0 : index
      %c0_11 = arith.constant 0 : index
      %12 = vector.load %arg7[%c0_10, %c0_11] : memref<8x32xf32, #tpu.memory_space<vmem>>, vector<8x32xf32>
      %c0_12 = arith.constant 0 : index
      %c0_13 = arith.constant 0 : index
      %13 = vector.load %arg5[%c0_12, %c0_13] : memref<1x32xf32, #tpu.memory_space<vmem>>, vector<1x32xf32>
      %14 = vector.broadcast %13 : vector<1x32xf32> to vector<8x32xf32>
      %15 = arith.addf %12, %14 : vector<8x32xf32>
      %cst_14 = arith.constant 0.000000e+00 : f32
      %16 = vector.broadcast %cst_14 : f32 to vector<8x32xf32>
      %17 = arith.maximumf %15, %16 : vector<8x32xf32>
      %c0_15 = arith.constant 0 : index
      %c0_16 = arith.constant 0 : index
      %18 = vector.load %arg6[%c0_15, %c0_16] : memref<8x32xf32, #tpu.memory_space<vmem>>, vector<8x32xf32>
      tpu.vector_store %arg6[%c0_15, %c0_16], %17 {strides = array<i32>} : memref<8x32xf32, #tpu.memory_space<vmem>>, vector<8x32xf32>,
    } else {
    }
    return
  }
  func.func @transform_0(%arg0: i32, %arg1: i32, %arg2: i32) -> (i32, i32) {
    %c0_i32 = arith.constant 0 : i32
    return %arg0, %arg2 : i32, i32
  }
  func.func @transform_1(%arg0: i32, %arg1: i32, %arg2: i32) -> (i32, i32) {
    %c0_i32 = arith.constant 0 : i32
    return %arg2, %arg1 : i32, i32
  }
  func.func @transform_2(%arg0: i32, %arg1: i32, %arg2: i32) -> (i32, i32) {
    %c0_i32 = arith.constant 0 : i32
    %c0_i32_0 = arith.constant 0 : i32
    return %c0_i32, %arg1 : i32, i32
  }
  func.func @transform_3(%arg0: i32, %arg1: i32, %arg2: i32) -> (i32, i32) {
    %c0_i32 = arith.constant 0 : i32
    return %arg0, %arg1 : i32, i32
  }
}

module attributes {stable_mosaic.version = 11 : i64} {
  func.func @_matmul_bias_kernel(%arg0: i32, %arg1: i32, %arg2: i32, %arg3: memref<8x32xf32, #tpu.memory_space<vmem>>, %arg4: memref<32x128xf32, #tpu.memory_space<vmem>>, %arg5: memref<1x128xf32, #tpu.memory_space<vmem>>, %arg6: memref<8x128xf32, #tpu.memory_space<vmem>>, %arg7: memref<8x128xf32, #tpu.memory_space<vmem>>) attributes {dimension_semantics = [#tpu.dimension_semantics<parallel>, #tpu.dimension_semantics<parallel>, #tpu.dimension_semantics<arbitrary>], iteration_bounds = array<i64: 1, 1, 1>, scalar_prefetch = 0 : i64, scratch_operands = 1 : i64, tpu.core_type = #tpu.core_type<tc>, window_params = [{transform_indices = @transform_0, window_bounds = array<i64: 8, 32>}, {transform_indices = @transform_1, window_bounds = array<i64: 32, 128>}, {transform_indices = @transform_2, window_bounds = array<i64: 1, 128>}, {transform_indices = @transform_3, window_bounds = array<i64: 8, 128>}]} {
    %c0_i32 = arith.constant 0 : i32
    %0 = arith.cmpi eq, %arg2, %c0_i32 : i32
    %1 = arith.extui %0 : i1 to i32
    %c0_i32_0 = arith.constant 0 : i32
    %2 = arith.cmpi ne, %1, %c0_i32_0 : i32
    scf.if %2 {
      %cst_10 = arith.constant 0.000000e+00 : f32
      %12 = vector.broadcast %cst_10 : f32 to vector<8x128xf32>
      %c0_11 = arith.constant 0 : index
      %c0_12 = arith.constant 0 : index
      %13 = vector.load %arg7[%c0_11, %c0_12] : memref<8x128xf32, #tpu.memory_space<vmem>>, vector<8x128xf32>
      tpu.vector_store %arg7[%c0_11, %c0_12], %12 {strides = array<i32>} : memref<8x128xf32, #tpu.memory_space<vmem>>, vector<8x128xf32>,
    } else {
    }
    %c0 = arith.constant 0 : index
    %c0_1 = arith.constant 0 : index
    %3 = vector.load %arg7[%c0, %c0_1] : memref<8x128xf32, #tpu.memory_space<vmem>>, vector<8x128xf32>
    %c0_2 = arith.constant 0 : index
    %c0_3 = arith.constant 0 : index
    %4 = vector.load %arg3[%c0_2, %c0_3] : memref<8x32xf32, #tpu.memory_space<vmem>>, vector<8x32xf32>
    %c0_4 = arith.constant 0 : index
    %c0_5 = arith.constant 0 : index
    %5 = vector.load %arg4[%c0_4, %c0_5] : memref<32x128xf32, #tpu.memory_space<vmem>>, vector<32x128xf32>
    %cst = arith.constant dense<0.000000e+00> : vector<8x128xf32>
    %6 = tpu.matmul %4, %5, %cst {dimension_numbers = #tpu.dot_dimension_numbers<[1], [0], [0], [1], [0, 0, 1, 1], [], []>} : vector<8x32xf32>, vector<32x128xf32>, vector<8x128xf32> -> vector<8x128xf32>
    %7 = arith.addf %3, %6 : vector<8x128xf32>
    %c0_6 = arith.constant 0 : index
    %c0_7 = arith.constant 0 : index
    %8 = vector.load %arg7[%c0_6, %c0_7] : memref<8x128xf32, #tpu.memory_space<vmem>>, vector<8x128xf32>
    tpu.vector_store %arg7[%c0_6, %c0_7], %7 {strides = array<i32>} : memref<8x128xf32, #tpu.memory_space<vmem>>, vector<8x128xf32>,
    %c0_i32_8 = arith.constant 0 : i32
    %9 = arith.cmpi eq, %arg2, %c0_i32_8 : i32
    %10 = arith.extui %9 : i1 to i32
    %c0_i32_9 = arith.constant 0 : i32
    %11 = arith.cmpi ne, %10, %c0_i32_9 : i32
    scf.if %11 {
      %c0_10 = arith.constant 0 : index
      %c0_11 = arith.constant 0 : index
      %12 = vector.load %arg7[%c0_10, %c0_11] : memref<8x128xf32, #tpu.memory_space<vmem>>, vector<8x128xf32>
      %c0_12 = arith.constant 0 : index
      %c0_13 = arith.constant 0 : index
      %13 = vector.load %arg5[%c0_12, %c0_13] : memref<1x128xf32, #tpu.memory_space<vmem>>, vector<1x128xf32>
      %14 = vector.broadcast %13 : vector<1x128xf32> to vector<8x128xf32>
      %15 = arith.addf %12, %14 : vector<8x128xf32>
      %c0_14 = arith.constant 0 : index
      %c0_15 = arith.constant 0 : index
      %16 = vector.load %arg6[%c0_14, %c0_15] : memref<8x128xf32, #tpu.memory_space<vmem>>, vector<8x128xf32>
      tpu.vector_store %arg6[%c0_14, %c0_15], %15 {strides = array<i32>} : memref<8x128xf32, #tpu.memory_space<vmem>>, vector<8x128xf32>,
    } else {
    }
    return
  }
  func.func @transform_0(%arg0: i32, %arg1: i32, %arg2: i32) -> (i32, i32) {
    %c0_i32 = arith.constant 0 : i32
    return %arg0, %arg2 : i32, i32
  }
  func.func @transform_1(%arg0: i32, %arg1: i32, %arg2: i32) -> (i32, i32) {
    %c0_i32 = arith.constant 0 : i32
    return %arg2, %arg1 : i32, i32
  }
  func.func @transform_2(%arg0: i32, %arg1: i32, %arg2: i32) -> (i32, i32) {
    %c0_i32 = arith.constant 0 : i32
    %c0_i32_0 = arith.constant 0 : i32
    return %c0_i32, %arg1 : i32, i32
  }
  func.func @transform_3(%arg0: i32, %arg1: i32, %arg2: i32) -> (i32, i32) {
    %c0_i32 = arith.constant 0 : i32
    return %arg0, %arg1 : i32, i32
  }
}

module attributes {stable_mosaic.version = 11 : i64} {
  func.func @_lstm_rec_kernel(%arg0: memref<3x2x128xf32, #tpu.memory_space<vmem>>, %arg1: memref<32x128xf32, #tpu.memory_space<vmem>>, %arg2: memref<3x2x32xf32, #tpu.memory_space<vmem>>) attributes {dimension_semantics = [], scalar_prefetch = 0 : i64, scratch_operands = 0 : i64, tpu.core_type = #tpu.core_type<tc>} {
    %c0 = arith.constant 0 : index
    %c0_0 = arith.constant 0 : index
    %0 = vector.load %arg1[%c0, %c0_0] : memref<32x128xf32, #tpu.memory_space<vmem>>, vector<32x128xf32>
    %cst = arith.constant 0.000000e+00 : f32
    %1 = vector.broadcast %cst : f32 to vector<2x32xf32>
    %cst_1 = arith.constant 0.000000e+00 : f32
    %2 = vector.broadcast %cst_1 : f32 to vector<2x32xf32>
    %c0_i32 = arith.constant 0 : i32
    %c3_i32 = arith.constant 3 : i32
    %3 = arith.addi %c0_i32, %c3_i32 : i32
    %c1_i32 = arith.constant 1 : i32
    %4:2 = scf.for %arg3 = %c0_i32 to %3 step %c1_i32 iter_args(%arg4 = %1, %arg5 = %2) -> (vector<2x32xf32>, vector<2x32xf32>)  : i32 {
      %5 = arith.index_cast %arg3 : i32 to index
      %c0_3 = arith.constant 0 : index
      %c0_4 = arith.constant 0 : index
      %6 = vector.load %arg0[%5, %c0_3, %c0_4] : memref<3x2x128xf32, #tpu.memory_space<vmem>>, vector<1x2x128xf32>
      %7 = vector.shape_cast %6 : vector<1x2x128xf32> to vector<2x128xf32>
      %cst_5 = arith.constant dense<0.000000e+00> : vector<2x128xf32>
      %8 = tpu.matmul %arg4, %0, %cst_5 {dimension_numbers = #tpu.dot_dimension_numbers<[1], [0], [0], [1], [0, 0, 1, 1], [], []>} : vector<2x32xf32>, vector<32x128xf32>, vector<2x128xf32> -> vector<2x128xf32>
      %9 = arith.addf %7, %8 : vector<2x128xf32>
      %10 = vector.extract_strided_slice %9 {offsets = [0, 0], sizes = [2, 32], strides = [1, 1]} : vector<2x128xf32> to vector<2x32xf32>
      %11 = arith.negf %10 : vector<2x32xf32>
      %12 = math.exp %11 : vector<2x32xf32>
      %cst_6 = arith.constant 1.000000e+00 : f32
      %13 = vector.broadcast %cst_6 : f32 to vector<2x32xf32>
      %14 = arith.addf %13, %12 : vector<2x32xf32>
      %15 = arith.divf %13, %14 : vector<2x32xf32>
      %16 = vector.extract_strided_slice %9 {offsets = [0, 32], sizes = [2, 32], strides = [1, 1]} : vector<2x128xf32> to vector<2x32xf32>
      %17 = arith.negf %16 : vector<2x32xf32>
      %18 = math.exp %17 : vector<2x32xf32>
      %cst_7 = arith.constant 1.000000e+00 : f32
      %19 = vector.broadcast %cst_7 : f32 to vector<2x32xf32>
      %20 = arith.addf %19, %18 : vector<2x32xf32>
      %21 = arith.divf %19, %20 : vector<2x32xf32>
      %22 = vector.extract_strided_slice %9 {offsets = [0, 64], sizes = [2, 32], strides = [1, 1]} : vector<2x128xf32> to vector<2x32xf32>
      %23 = math.tanh %22 : vector<2x32xf32>
      %24 = vector.extract_strided_slice %9 {offsets = [0, 96], sizes = [2, 32], strides = [1, 1]} : vector<2x128xf32> to vector<2x32xf32>
      %25 = arith.negf %24 : vector<2x32xf32>
      %26 = math.exp %25 : vector<2x32xf32>
      %cst_8 = arith.constant 1.000000e+00 : f32
      %27 = vector.broadcast %cst_8 : f32 to vector<2x32xf32>
      %28 = arith.addf %27, %26 : vector<2x32xf32>
      %29 = arith.divf %27, %28 : vector<2x32xf32>
      %30 = arith.mulf %21, %arg5 : vector<2x32xf32>
      %31 = arith.mulf %15, %23 : vector<2x32xf32>
      %32 = arith.addf %30, %31 : vector<2x32xf32>
      %33 = math.tanh %32 : vector<2x32xf32>
      %34 = arith.mulf %29, %33 : vector<2x32xf32>
      %35 = arith.index_cast %arg3 : i32 to index
      %c0_9 = arith.constant 0 : index
      %c0_10 = arith.constant 0 : index
      %36 = vector.load %arg2[%35, %c0_9, %c0_10] : memref<3x2x32xf32, #tpu.memory_space<vmem>>, vector<1x2x32xf32>
      %37 = vector.shape_cast %36 : vector<1x2x32xf32> to vector<2x32xf32>
      %38 = vector.shape_cast %34 : vector<2x32xf32> to vector<1x2x32xf32>
      tpu.vector_store %arg2[%35, %c0_9, %c0_10], %38 {strides = array<i32>} : memref<3x2x32xf32, #tpu.memory_space<vmem>>, vector<1x2x32xf32>,
      scf.yield %34, %32 : vector<2x32xf32>, vector<2x32xf32>
    }
    %c3_i32_2 = arith.constant 3 : i32
    return
  }
}

module attributes {stable_mosaic.version = 11 : i64} {
  func.func @_bias_act_scale_kernel(%arg0: i32, %arg1: memref<2x16x16xf32, #tpu.memory_space<vmem>>, %arg2: memref<1x16x1xf32, #tpu.memory_space<vmem>>, %arg3: memref<2x16x16xf32, #tpu.memory_space<vmem>>) attributes {dimension_semantics = [#tpu.dimension_semantics<parallel>], iteration_bounds = array<i64: 1>, scalar_prefetch = 0 : i64, scratch_operands = 0 : i64, tpu.core_type = #tpu.core_type<tc>, window_params = [{transform_indices = @transform_0, window_bounds = array<i64: 2, 16, 16>}, {pipeline_mode = #tpu.pipeline_mode<synchronous>, transform_indices = @transform_1, window_bounds = array<i64: 1, 16, 1>}, {transform_indices = @transform_2, window_bounds = array<i64: 2, 16, 16>}]} {
    %c0 = arith.constant 0 : index
    %c0_0 = arith.constant 0 : index
    %c0_1 = arith.constant 0 : index
    %0 = vector.load %arg1[%c0, %c0_0, %c0_1] : memref<2x16x16xf32, #tpu.memory_space<vmem>>, vector<2x16x16xf32>
    %c0_2 = arith.constant 0 : index
    %c0_3 = arith.constant 0 : index
    %c0_4 = arith.constant 0 : index
    %1 = vector.load %arg2[%c0_2, %c0_3, %c0_4] : memref<1x16x1xf32, #tpu.memory_space<vmem>>, vector<1x16x1xf32>
    %2 = vector.broadcast %1 : vector<1x16x1xf32> to vector<2x16x16xf32>
    %3 = arith.addf %0, %2 : vector<2x16x16xf32>
    %cst = arith.constant 0.000000e+00 : f32
    %4 = vector.broadcast %cst : f32 to vector<2x16x16xf32>
    %5 = arith.maximumf %3, %4 : vector<2x16x16xf32>
    %c0_5 = arith.constant 0 : index
    %c0_6 = arith.constant 0 : index
    %c0_7 = arith.constant 0 : index
    %6 = vector.load %arg3[%c0_5, %c0_6, %c0_7] : memref<2x16x16xf32, #tpu.memory_space<vmem>>, vector<2x16x16xf32>
    tpu.vector_store %arg3[%c0_5, %c0_6, %c0_7], %5 {strides = array<i32>} : memref<2x16x16xf32, #tpu.memory_space<vmem>>, vector<2x16x16xf32>,
    return
  }
  func.func @transform_0(%arg0: i32) -> (i32, i32, i32) {
    %c0_i32 = arith.constant 0 : i32
    %c0_i32_0 = arith.constant 0 : i32
    %c0_i32_1 = arith.constant 0 : i32
    return %c0_i32, %c0_i32_0, %arg0 : i32, i32, i32
  }
  func.func @transform_1(%arg0: i32) -> (i32, i32, i32) {
    %c0_i32 = arith.constant 0 : i32
    %c0_i32_0 = arith.constant 0 : i32
    %c0_i32_1 = arith.constant 0 : i32
    %c0_i32_2 = arith.constant 0 : i32
    return %c0_i32, %c0_i32_0, %c0_i32_1 : i32, i32, i32
  }
  func.func @transform_2(%arg0: i32) -> (i32, i32, i32) {
    %c0_i32 = arith.constant 0 : i32
    %c0_i32_0 = arith.constant 0 : i32
    %c0_i32_1 = arith.constant 0 : i32
    return %c0_i32, %c0_i32_0, %arg0 : i32, i32, i32
  }
}

module attributes {stable_mosaic.version = 11 : i64} {
  func.func @_matmul_bias_kernel(%arg0: i32, %arg1: i32, %arg2: i32, %arg3: memref<32x16xf32, #tpu.memory_space<vmem>>, %arg4: memref<16x8xf32, #tpu.memory_space<vmem>>, %arg5: memref<1x8xf32, #tpu.memory_space<vmem>>, %arg6: memref<32x8xf32, #tpu.memory_space<vmem>>, %arg7: memref<32x8xf32, #tpu.memory_space<vmem>>) attributes {dimension_semantics = [#tpu.dimension_semantics<parallel>, #tpu.dimension_semantics<parallel>, #tpu.dimension_semantics<arbitrary>], iteration_bounds = array<i64: 1, 1, 1>, scalar_prefetch = 0 : i64, scratch_operands = 1 : i64, tpu.core_type = #tpu.core_type<tc>, window_params = [{transform_indices = @transform_0, window_bounds = array<i64: 32, 16>}, {transform_indices = @transform_1, window_bounds = array<i64: 16, 8>}, {transform_indices = @transform_2, window_bounds = array<i64: 1, 8>}, {transform_indices = @transform_3, window_bounds = array<i64: 32, 8>}]} {
    %c0_i32 = arith.constant 0 : i32
    %0 = arith.cmpi eq, %arg2, %c0_i32 : i32
    %1 = arith.extui %0 : i1 to i32
    %c0_i32_0 = arith.constant 0 : i32
    %2 = arith.cmpi ne, %1, %c0_i32_0 : i32
    scf.if %2 {
      %cst_10 = arith.constant 0.000000e+00 : f32
      %12 = vector.broadcast %cst_10 : f32 to vector<32x8xf32>
      %c0_11 = arith.constant 0 : index
      %c0_12 = arith.constant 0 : index
      %13 = vector.load %arg7[%c0_11, %c0_12] : memref<32x8xf32, #tpu.memory_space<vmem>>, vector<32x8xf32>
      tpu.vector_store %arg7[%c0_11, %c0_12], %12 {strides = array<i32>} : memref<32x8xf32, #tpu.memory_space<vmem>>, vector<32x8xf32>,
    } else {
    }
    %c0 = arith.constant 0 : index
    %c0_1 = arith.constant 0 : index
    %3 = vector.load %arg7[%c0, %c0_1] : memref<32x8xf32, #tpu.memory_space<vmem>>, vector<32x8xf32>
    %c0_2 = arith.constant 0 : index
    %c0_3 = arith.constant 0 : index
    %4 = vector.load %arg3[%c0_2, %c0_3] : memref<32x16xf32, #tpu.memory_space<vmem>>, vector<32x16xf32>
    %c0_4 = arith.constant 0 : index
    %c0_5 = arith.constant 0 : index
    %5 = vector.load %arg4[%c0_4, %c0_5] : memref<16x8xf32, #tpu.memory_space<vmem>>, vector<16x8xf32>
    %cst = arith.constant dense<0.000000e+00> : vector<32x8xf32>
    %6 = tpu.matmul %4, %5, %cst {dimension_numbers = #tpu.dot_dimension_numbers<[1], [0], [0], [1], [0, 0, 1, 1], [], []>} : vector<32x16xf32>, vector<16x8xf32>, vector<32x8xf32> -> vector<32x8xf32>
    %7 = arith.addf %3, %6 : vector<32x8xf32>
    %c0_6 = arith.constant 0 : index
    %c0_7 = arith.constant 0 : index
    %8 = vector.load %arg7[%c0_6, %c0_7] : memref<32x8xf32, #tpu.memory_space<vmem>>, vector<32x8xf32>
    tpu.vector_store %arg7[%c0_6, %c0_7], %7 {strides = array<i32>} : memref<32x8xf32, #tpu.memory_space<vmem>>, vector<32x8xf32>,
    %c0_i32_8 = arith.constant 0 : i32
    %9 = arith.cmpi eq, %arg2, %c0_i32_8 : i32
    %10 = arith.extui %9 : i1 to i32
    %c0_i32_9 = arith.constant 0 : i32
    %11 = arith.cmpi ne, %10, %c0_i32_9 : i32
    scf.if %11 {
      %c0_10 = arith.constant 0 : index
      %c0_11 = arith.constant 0 : index
      %12 = vector.load %arg7[%c0_10, %c0_11] : memref<32x8xf32, #tpu.memory_space<vmem>>, vector<32x8xf32>
      %c0_12 = arith.constant 0 : index
      %c0_13 = arith.constant 0 : index
      %13 = vector.load %arg5[%c0_12, %c0_13] : memref<1x8xf32, #tpu.memory_space<vmem>>, vector<1x8xf32>
      %14 = vector.broadcast %13 : vector<1x8xf32> to vector<32x8xf32>
      %15 = arith.addf %12, %14 : vector<32x8xf32>
      %c0_14 = arith.constant 0 : index
      %c0_15 = arith.constant 0 : index
      %16 = vector.load %arg6[%c0_14, %c0_15] : memref<32x8xf32, #tpu.memory_space<vmem>>, vector<32x8xf32>
      tpu.vector_store %arg6[%c0_14, %c0_15], %15 {strides = array<i32>} : memref<32x8xf32, #tpu.memory_space<vmem>>, vector<32x8xf32>,
    } else {
    }
    return
  }
  func.func @transform_0(%arg0: i32, %arg1: i32, %arg2: i32) -> (i32, i32) {
    %c0_i32 = arith.constant 0 : i32
    return %arg0, %arg2 : i32, i32
  }
  func.func @transform_1(%arg0: i32, %arg1: i32, %arg2: i32) -> (i32, i32) {
    %c0_i32 = arith.constant 0 : i32
    return %arg2, %arg1 : i32, i32
  }
  func.func @transform_2(%arg0: i32, %arg1: i32, %arg2: i32) -> (i32, i32) {
    %c0_i32 = arith.constant 0 : i32
    %c0_i32_0 = arith.constant 0 : i32
    return %c0_i32, %arg1 : i32, i32
  }
  func.func @transform_3(%arg0: i32, %arg1: i32, %arg2: i32) -> (i32, i32) {
    %c0_i32 = arith.constant 0 : i32
    return %arg0, %arg1 : i32, i32
  }
}

module attributes {stable_mosaic.version = 11 : i64} {
  func.func @_bias_act_scale_kernel(%arg0: i32, %arg1: memref<2x1x68xf32, #tpu.memory_space<vmem>>, %arg2: memref<1x1x1xf32, #tpu.memory_space<vmem>>, %arg3: memref<2x1x1xf32, #tpu.memory_space<vmem>>, %arg4: memref<2x1x68xf32, #tpu.memory_space<vmem>>) attributes {dimension_semantics = [#tpu.dimension_semantics<parallel>], iteration_bounds = array<i64: 1>, scalar_prefetch = 0 : i64, scratch_operands = 0 : i64, tpu.core_type = #tpu.core_type<tc>, window_params = [{transform_indices = @transform_0, window_bounds = array<i64: 2, 1, 68>}, {pipeline_mode = #tpu.pipeline_mode<synchronous>, transform_indices = @transform_1, window_bounds = array<i64: 1, 1, 1>}, {pipeline_mode = #tpu.pipeline_mode<synchronous>, transform_indices = @transform_2, window_bounds = array<i64: 2, 1, 1>}, {transform_indices = @transform_3, window_bounds = array<i64: 2, 1, 68>}]} {
    %c0 = arith.constant 0 : index
    %c0_0 = arith.constant 0 : index
    %c0_1 = arith.constant 0 : index
    %0 = vector.load %arg1[%c0, %c0_0, %c0_1] : memref<2x1x68xf32, #tpu.memory_space<vmem>>, vector<2x1x68xf32>
    %c0_2 = arith.constant 0 : index
    %c0_3 = arith.constant 0 : index
    %c0_4 = arith.constant 0 : index
    %1 = vector.load %arg2[%c0_2, %c0_3, %c0_4] : memref<1x1x1xf32, #tpu.memory_space<vmem>>, vector<1x1x1xf32>
    %2 = vector.broadcast %1 : vector<1x1x1xf32> to vector<2x1x68xf32>
    %3 = arith.addf %0, %2 : vector<2x1x68xf32>
    %c0_5 = arith.constant 0 : index
    %c0_6 = arith.constant 0 : index
    %c0_7 = arith.constant 0 : index
    %4 = vector.load %arg3[%c0_5, %c0_6, %c0_7] : memref<2x1x1xf32, #tpu.memory_space<vmem>>, vector<2x1x1xf32>
    %5 = vector.broadcast %4 : vector<2x1x1xf32> to vector<2x1x68xf32>
    %6 = arith.mulf %3, %5 : vector<2x1x68xf32>
    %c0_8 = arith.constant 0 : index
    %c0_9 = arith.constant 0 : index
    %c0_10 = arith.constant 0 : index
    %7 = vector.load %arg4[%c0_8, %c0_9, %c0_10] : memref<2x1x68xf32, #tpu.memory_space<vmem>>, vector<2x1x68xf32>
    tpu.vector_store %arg4[%c0_8, %c0_9, %c0_10], %6 {strides = array<i32>} : memref<2x1x68xf32, #tpu.memory_space<vmem>>, vector<2x1x68xf32>,
    return
  }
  func.func @transform_0(%arg0: i32) -> (i32, i32, i32) {
    %c0_i32 = arith.constant 0 : i32
    %c0_i32_0 = arith.constant 0 : i32
    %c0_i32_1 = arith.constant 0 : i32
    return %c0_i32, %c0_i32_0, %arg0 : i32, i32, i32
  }
  func.func @transform_1(%arg0: i32) -> (i32, i32, i32) {
    %c0_i32 = arith.constant 0 : i32
    %c0_i32_0 = arith.constant 0 : i32
    %c0_i32_1 = arith.constant 0 : i32
    %c0_i32_2 = arith.constant 0 : i32
    return %c0_i32, %c0_i32_0, %c0_i32_1 : i32, i32, i32
  }
  func.func @transform_2(%arg0: i32) -> (i32, i32, i32) {
    %c0_i32 = arith.constant 0 : i32
    %c0_i32_0 = arith.constant 0 : i32
    %c0_i32_1 = arith.constant 0 : i32
    %c0_i32_2 = arith.constant 0 : i32
    return %c0_i32, %c0_i32_0, %c0_i32_1 : i32, i32, i32
  }
  func.func @transform_3(%arg0: i32) -> (i32, i32, i32) {
    %c0_i32 = arith.constant 0 : i32
    %c0_i32_0 = arith.constant 0 : i32
    %c0_i32_1 = arith.constant 0 : i32
    return %c0_i32, %c0_i32_0, %arg0 : i32, i32, i32
  }
}

</mosaic_0001>

<llo_original>
// kernel: forward.13
$region0: #{forward.13}
  #allocation0 [shape = 'u32[]', space=smem, size = 0x4, offset = 0x4, fixed_abs, tag = 'smem constant byte address 0x4 - core index']
  #allocation1 [shape = 'u32[72,128]{1,0:T(1,128)}', space=vmem, size = 0x9000, scoped, tag = 'internal scratch']
  %s0 = inlined_call_operand.vmem [shape: f32[2,1,64], index: 0, kind: input, shape index: {}]
  %s1 = inlined_call_operand.vmem [shape: f32[2,1,1], index: 1, kind: input, shape index: {}]
  %s2 = inlined_call_operand.vmem [shape: f32[2,1,64], index: 2, kind: output, shape index: {}]
  %s3 = sld [smem:[#allocation0]]
  $region18: #{forward.13} parent=0
    _
  %s5 = ssub.s32 1, %s3
  %s6 = scalar_select 0, %s5, %s3
  // Predicated region
  $region2: #{forward.13} parent=0 // pred_check
    _
  $region3: #{forward.13} parent=0 // pred_check_branch
    %8 = sbr.rel (0) target = $region5
  $region4: #{forward.13} parent=0 // pred_region
    _
  $region5: #{forward.13} parent=0 // pred_fallthru
    _
  // Predicated region
  $region6: #{forward.13} parent=0 // pred_check
    _
  $region7: #{forward.13} parent=0 // pred_check_branch
    %10 = sbr.rel (0) target = $region9
  $region8: #{forward.13} parent=0 // pred_region
    _
  $region9: #{forward.13} parent=0 // pred_fallthru
    _
  %v11 = vld [vmem:[%s0] sm:$0x1]
  %v12 = vld [vmem:[%s0 + $0x1] sm:$0x1]
  %v13 = vld [vmem:[%s1] sm:$0x1]
  %v14 = vld [vmem:[%s1 + $0x1] sm:$0x1]
  %16 = vset.pattern.permute.xlu0 0
  %17 = vperm.xlu0 %16, %v13
  %v18 = vpop.permute.xlu0 %17
  %v20 = vperm.slane %v18, 0
  %22 = vset.pattern.permute.xlu0 0
  %23 = vperm.xlu0 %22, %v14
  %v24 = vpop.permute.xlu0 %23
  %v26 = vperm.slane %v24, 0
  %v27 = vmul.f32 %v11, %v20
  %v28 = vmul.f32 %v12, %v26
  %vm29 = vcmask 516096
  %30 = vst.msk [vmem:[%s2] sm:$0x1] %vm29, %v27
  %31 = vst.msk [vmem:[%s2 + $0x1] sm:$0x1] %vm29, %v28
  // Predicated region
  $region10: #{forward.13} parent=0 // pred_check
    _
  $region11: #{forward.13} parent=0 // pred_check_branch
    %33 = sbr.rel (0) target = $region13
  $region12: #{forward.13} parent=0 // pred_region
    _
  $region13: #{forward.13} parent=0 // pred_fallthru
    _
  // Predicated region
  $region14: #{forward.13} parent=0 // pred_check
    _
  $region15: #{forward.13} parent=0 // pred_check_branch
    %35 = sbr.rel (0) target = $region17
  $region16: #{forward.13} parent=0 // pred_region
    _
  $region17: #{forward.13} parent=0 // pred_fallthru
    _

// kernel: forward.12
$region0: #{forward.12}
  #allocation0 [shape = 'u32[]', space=smem, size = 0x4, offset = 0x4, fixed_abs, tag = 'smem constant byte address 0x4 - core index']
  #allocation1 [shape = 'u32[72,128]{1,0:T(1,128)}', space=vmem, size = 0x9000, scoped, tag = 'internal scratch']
  #allocation2 [shape = 'f32[2,1]{1,0:T(2,128)}', space=vmem, size = 0x400, scoped, tag = 'scratch operand']
  #allocation3 [shape = 'f32[2,1]{1,0:T(2,128)}', space=vmem, size = 0x400, scoped, tag = 'scratch operand']
  %s0 = inlined_call_operand.hbm [shape: f32[2,1,64], index: 0, kind: input, shape index: {}]
  %s1 = inlined_call_operand.vmem [shape: f32[2,1], index: 1, kind: output, shape index: {}]
  %s2 = sld [smem:[#allocation0]]
  $region26: #{forward.12} parent=0
    _
  %s4 = ssub.s32 1, %s2
  %s5 = scalar_select 0, %s4, %s2
  $region1: #{forward.12} parent=0
    #allocation4 [shape = 'u8[1024]{0}', space=vmem, size = 0x400, scoped, tag = 'input window, operand 0, single buffered']
    #allocation5 [shape = 's32[1]{0}', space=sflag, size = 0x4, scoped, tag = 'scoped memory for forward.12']
    %6 = vsyncpa [#allocation5], 0
    // Predicated region
    $region2: #{forward.12} parent=1 // pred_check
      _
    $region3: #{forward.12} parent=1 // pred_check_branch
      %8 = sbr.rel (0) target = $region5
    $region4: #{forward.12} parent=1 // pred_region
      %10 = vsyncadd [#allocation5], 0
      %s11 = sshll.u32 %s0, 4
      %s12 = int_to_ptr.hbm [resolvable:$true] %s11
      %s13 = sshll.u32 [#allocation4], 4
      %s14 = int_to_ptr.vmem [resolvable:$true] %s13
      %19 = dma.hbm_to_vmem [thread:$0]  %s12, 32, %s14, [#allocation5], 16, 16, 1
    $region5: #{forward.12} parent=1 // pred_fallthru
      _
    // Predicated region
    $region6: #{forward.12} parent=1 // pred_check
      _
    $region7: #{forward.12} parent=1 // pred_check_branch
      %21 = sbr.rel (0) target = $region9
    $region8: #{forward.12} parent=1 // pred_region
      %23 = dma.done [#allocation5], 32
    $region9: #{forward.12} parent=1 // pred_fallthru
      _
    %p24 = scmp.eq.s32.totalorder 0, 0
    // Predicated region
    $region10: #{forward.12} parent=1 // pred_check
      %p25 = pneg %p24
    $region11: #{forward.12} parent=1 // pred_check_branch
      %27 = sbr.rel (%p25) target = $region13
    $region12: #{forward.12} parent=1 // pred_region
      %vm28 = vcmask 1024
      %29 = vst.msk [vmem:[#allocation2] sm:$0x3] %vm28, 0.0
      %30 = vst.msk [vmem:[#allocation3] sm:$0x3] %vm28, 0.0
    $region13: #{forward.12} parent=1 // pred_fallthru
      _
    %v31 = vld [vmem:[#allocation4] sm:$0x1]
    %v32 = vld [vmem:[#allocation4 + $0x1] sm:$0x1]
    %v33 = vadd.f32 %v31, 0.0
    %v34 = vadd.f32 %v32, 0.0
    %v35 = vld [vmem:[#allocation2] sm:$0x3]
    %38 = vst [vmem:[#allocation1] ss:$9 sm:$0xff] %v33
    %s39 = scalar_lea.vmem [#allocation1], 1
    %40 = vst [vmem:[%s39] ss:$9 sm:$0xff] %v34
    %v41 = vld [vmem:[#allocation1] sm:$0xff]
    %vm43 = vcmask 517120
    %v44 = vsel %vm43, %v41, 0.0
    %45 = vadd.xlane.f32.xlu0 %v44
    %v46 = vpop.xlane.xlu0 %45
    %v47 = vadd.f32 %v35, %v46
    %vm48 = vcmask 1024
    %49 = vst.msk [vmem:[#allocation2] sm:$0x3] %vm48, %v47
    %v50 = vld [vmem:[#allocation3] sm:$0x3]
    %v51 = vmul.f32 %v33, %v33
    %v52 = vmul.f32 %v34, %v34
    %55 = vst [vmem:[#allocation1] ss:$9 sm:$0xff] %v51
    %s56 = scalar_lea.vmem [#allocation1], 1
    %57 = vst [vmem:[%s56] ss:$9 sm:$0xff] %v52
    %v58 = vld [vmem:[#allocation1] sm:$0xff]
    %v60 = vsel %vm43, %v58, 0.0
    %61 = vadd.xlane.f32.xlu0 %v60
    %v62 = vpop.xlane.xlu0 %61
    %v63 = vadd.f32 %v50, %v62
    %64 = vst.msk [vmem:[#allocation3] sm:$0x3] %vm48, %v63
    // Predicated region
    $region14: #{forward.12} parent=1 // pred_check
      %p65 = pneg %p24
    $region15: #{forward.12} parent=1 // pred_check_branch
      %67 = sbr.rel (%p65) target = $region17
    $region16: #{forward.12} parent=1 // pred_region
      %v68 = vld [vmem:[#allocation2] sm:$0x3]
      %v69 = vmul.f32 %v68, 0.015625
      %v70 = vld [vmem:[#allocation3] sm:$0x3]
      %v71 = vmul.f32 %v68, %v69
      %v72 = vsub.f32 %v70, %v71
      %v73 = vmul.f32 %v72, 0.015873017
      %v74 = vmax.f32 %v73, 0.0
      %v75 = vrsqrt.pop %v74
      %v76 = vmul.f32 %v75, %v74
      %v77 = vmul.f32 %v76, %v75
      %v78 = vmul.f32 0.5, %v77
      %v79 = vsub.f32 1.5, %v78
      %v80 = vmul.f32 %v75, %v79
      %v81 = vmul.f32 %v74, %v80
      %vm82 = vcmp.eq.f32.partialorder %v74, inf
      %v83 = vsel %vm82, %v74, %v81
      %vm84 = vcmp.eq.f32.partialorder %v74, 0.0
      %v85 = vand.u32 %v74, 2147483648
      %v86 = vsel %vm84, %v85, %v83
      %87 = vst.msk [vmem:[%s1] sm:$0x3] %vm48, %v86
    $region17: #{forward.12} parent=1 // pred_fallthru
      _
    // Predicated region
    $region18: #{forward.12} parent=1 // pred_check
      _
    $region19: #{forward.12} parent=1 // pred_check_branch
      %89 = sbr.rel (0) target = $region21
    $region20: #{forward.12} parent=1 // pred_region
      _
    $region21: #{forward.12} parent=1 // pred_fallthru
      _
    // Predicated region
    $region22: #{forward.12} parent=1 // pred_check
      _
    $region23: #{forward.12} parent=1 // pred_check_branch
      %91 = sbr.rel (0) target = $region25
    $region24: #{forward.12} parent=1 // pred_region
      _
    $region25: #{forward.12} parent=1 // pred_fallthru
      _
    %92 = vsyncpa [#allocation5], 1

// kernel: forward.14
$region0: #{forward.14}
  #allocation0 [shape = 'u32[]', space=smem, size = 0x4, offset = 0x4, fixed_abs, tag = 'smem constant byte address 0x4 - core index']
  #allocation1 [shape = 'u32[72,128]{1,0:T(1,128)}', space=vmem, size = 0x9000, scoped, tag = 'internal scratch']
  #allocation2 [shape = 'f32[32,16]{1,0:T(8,128)}', space=vmem, size = 0x4000, scoped, tag = 'scratch operand']
  %s0 = inlined_call_operand.vmem [shape: f32[32,8], index: 0, kind: input, shape index: {}]
  %s1 = inlined_call_operand.vmem [shape: f32[8,16], index: 1, kind: input, shape index: {}]
  %s2 = inlined_call_operand.vmem [shape: f32[1,16], index: 2, kind: input, shape index: {}]
  %s3 = inlined_call_operand.vmem [shape: f32[32,16], index: 3, kind: output, shape index: {}]
  %s4 = sld [smem:[#allocation0]]
  $region30: #{forward.14} parent=0
    _
  %s6 = ssub.s32 1, %s4
  %s7 = scalar_select 0, %s6, %s4
  // Predicated region
  $region2: #{forward.14} parent=0 // pred_check
    _
  $region3: #{forward.14} parent=0 // pred_check_branch
    %9 = sbr.rel (0) target = $region5
  $region4: #{forward.14} parent=0 // pred_region
    _
  $region5: #{forward.14} parent=0 // pred_fallthru
    _
  // Predicated region
  $region6: #{forward.14} parent=0 // pred_check
    _
  $region7: #{forward.14} parent=0 // pred_check_branch
    %11 = sbr.rel (0) target = $region9
  $region8: #{forward.14} parent=0 // pred_region
    _
  $region9: #{forward.14} parent=0 // pred_fallthru
    _
  // Predicated region
  $region10: #{forward.14} parent=0 // pred_check
    _
  $region11: #{forward.14} parent=0 // pred_check_branch
    %13 = sbr.rel (0) target = $region13
  $region12: #{forward.14} parent=0 // pred_region
    _
  $region13: #{forward.14} parent=0 // pred_fallthru
    _
  %p14 = scmp.eq.s32.totalorder 0, 0
  // Predicated region
  $region14: #{forward.14} parent=0 // pred_check
    %p15 = pneg %p14
  $region15: #{forward.14} parent=0 // pred_check_branch
    %17 = sbr.rel (%p15) target = $region17
  $region16: #{forward.14} parent=0 // pred_region
    %vm18 = vcmask 130048
    %19 = vst.msk [vmem:[#allocation2] sm:$0xff] %vm18, 0.0
    %20 = vst.msk [vmem:[#allocation2 + $0x8] sm:$0xff] %vm18, 0.0
    %21 = vst.msk [vmem:[#allocation2 + $0x10] sm:$0xff] %vm18, 0.0
    %22 = vst.msk [vmem:[#allocation2 + $0x18] sm:$0xff] %vm18, 0.0
  $region17: #{forward.14} parent=0 // pred_fallthru
    _
  %v23 = vld [vmem:[#allocation2] sm:$0xff]
  %v24 = vld [vmem:[#allocation2 + $0x8] sm:$0xff]
  %v25 = vld [vmem:[#allocation2 + $0x10] sm:$0xff]
  %v26 = vld [vmem:[#allocation2 + $0x18] sm:$0xff]
  %v27 = vld [vmem:[%s0] sm:$0xff]
  %v28 = vld [vmem:[%s0 + $0x8] sm:$0xff]
  %v29 = vld [vmem:[%s0 + $0x10] sm:$0xff]
  %v30 = vld [vmem:[%s0 + $0x18] sm:$0xff]
  %v31 = vld [vmem:[%s1] sm:$0xff]
  %vm32 = vcmask 64512
  %v34 = vsel %vm32, %v27, 0
  %v37 = vsel %vm32, %v28, 0
  %v40 = vsel %vm32, %v29, 0
  %v43 = vsel %vm32, %v30, 0
  %45 = vmatpush.msra.mxu0 0.0
  %46 = vmatpush.msra.mxu0 0.0
  %47 = vmatpush.msra.mxu0 0.0
  %48 = vmatpush.msra.mxu0 0.0
  %49 = vmatpush.msra.mxu0 0.0
  %50 = vmatpush.msra.mxu0 0.0
  %51 = vmatpush.msra.mxu0 0.0
  %52 = vmatpush.msra.mxu0 0.0
  %53 = vmatpush.msra.mxu0 0.0
  %54 = vmatpush.msra.mxu0 0.0
  %55 = vmatpush.msra.mxu0 0.0
  %56 = vmatpush.msra.mxu0 0.0
  %57 = vmatpush.msra.mxu0 0.0
  %58 = vmatpush.msra.mxu0 0.0
  %59 = vmatpush.msra.mxu0 0.0
  %60 = vmatpush.msra.mxu0 %v31
  %61 = vmatmul.f32.gmra.mxu0 %v34
  %v62 = vpop.f32.mrf.mxu0
  %v63 = vadd.f32 0.0, %v62
  %64 = vmatmul.f32.gmra.mxu0 %v37
  %v65 = vpop.f32.mrf.mxu0
  %v66 = vadd.f32 0.0, %v65
  %67 = vmatmul.f32.gmra.mxu0 %v40
  %v68 = vpop.f32.mrf.mxu0
  %v69 = vadd.f32 0.0, %v68
  %70 = vmatmul.f32.gmra.mxu0 %v43
  %v71 = vpop.f32.mrf.mxu0
  %v72 = vadd.f32 0.0, %v71
  %73 = vdwg.mxu0
  %v74 = vadd.f32 %v23, %v63
  %v75 = vadd.f32 %v24, %v66
  %v76 = vadd.f32 %v25, %v69
  %v77 = vadd.f32 %v26, %v72
  %vm78 = vcmask 130048
  %79 = vst.msk [vmem:[#allocation2] sm:$0xff] %vm78, %v74
  %80 = vst.msk [vmem:[#allocation2 + $0x8] sm:$0xff] %vm78, %v75
  %81 = vst.msk [vmem:[#allocation2 + $0x10] sm:$0xff] %vm78, %v76
  %82 = vst.msk [vmem:[#allocation2 + $0x18] sm:$0xff] %vm78, %v77
  // Predicated region
  $region18: #{forward.14} parent=0 // pred_check
    %p83 = pneg %p14
  $region19: #{forward.14} parent=0 // pred_check_branch
    %85 = sbr.rel (%p83) target = $region21
  $region20: #{forward.14} parent=0 // pred_region
    %v86 = vld [vmem:[#allocation2] sm:$0xff]
    %v87 = vld [vmem:[#allocation2 + $0x8] sm:$0xff]
    %v88 = vld [vmem:[#allocation2 + $0x10] sm:$0xff]
    %v89 = vld [vmem:[#allocation2 + $0x18] sm:$0xff]
    %v90 = vld [vmem:[%s2] sm:$0x1]
    %v92 = vperm.slane %v90, 0
    %v94 = vadd.f32 %v86, %v92
    %v95 = vadd.f32 %v87, %v92
    %v96 = vadd.f32 %v88, %v92
    %v97 = vadd.f32 %v89, %v92
    %v98 = vmax.f32 %v94, 0.0
    %v99 = vmax.f32 %v95, 0.0
    %v100 = vmax.f32 %v96, 0.0
    %v101 = vmax.f32 %v97, 0.0
    %102 = vst.msk [vmem:[%s3] sm:$0xff] %vm78, %v98
    %103 = vst.msk [vmem:[%s3 + $0x8] sm:$0xff] %vm78, %v99
    %104 = vst.msk [vmem:[%s3 + $0x10] sm:$0xff] %vm78, %v100
    %105 = vst.msk [vmem:[%s3 + $0x18] sm:$0xff] %vm78, %v101
  $region21: #{forward.14} parent=0 // pred_fallthru
    _
  // Predicated region
  $region22: #{forward.14} parent=0 // pred_check
    _
  $region23: #{forward.14} parent=0 // pred_check_branch
    %107 = sbr.rel (0) target = $region25
  $region24: #{forward.14} parent=0 // pred_region
    _
  $region25: #{forward.14} parent=0 // pred_fallthru
    _
  // Predicated region
  $region26: #{forward.14} parent=0 // pred_check
    _
  $region27: #{forward.14} parent=0 // pred_check_branch
    %109 = sbr.rel (0) target = $region29
  $region28: #{forward.14} parent=0 // pred_region
    _
  $region29: #{forward.14} parent=0 // pred_fallthru
    _

// kernel: forward.15
$region0: #{forward.15}
  #allocation0 [shape = 'u32[]', space=smem, size = 0x4, offset = 0x4, fixed_abs, tag = 'smem constant byte address 0x4 - core index']
  #allocation1 [shape = 'u32[72,128]{1,0:T(1,128)}', space=vmem, size = 0x9000, scoped, tag = 'internal scratch']
  #allocation2 [shape = 'f32[8,32]{1,0:T(8,128)}', space=vmem, size = 0x1000, scoped, tag = 'scratch operand']
  %s0 = inlined_call_operand.vmem [shape: f32[8,128], index: 0, kind: input, shape index: {}]
  %s1 = inlined_call_operand.vmem [shape: f32[128,32], index: 1, kind: input, shape index: {}]
  %s2 = inlined_call_operand.vmem [shape: f32[1,32], index: 2, kind: input, shape index: {}]
  %s3 = inlined_call_operand.vmem [shape: f32[8,32], index: 3, kind: output, shape index: {}]
  %s4 = sld [smem:[#allocation0]]
  $region30: #{forward.15} parent=0
    _
  %s6 = ssub.s32 1, %s4
  %s7 = scalar_select 0, %s6, %s4
  // Predicated region
  $region2: #{forward.15} parent=0 // pred_check
    _
  $region3: #{forward.15} parent=0 // pred_check_branch
    %9 = sbr.rel (0) target = $region5
  $region4: #{forward.15} parent=0 // pred_region
    _
  $region5: #{forward.15} parent=0 // pred_fallthru
    _
  // Predicated region
  $region6: #{forward.15} parent=0 // pred_check
    _
  $region7: #{forward.15} parent=0 // pred_check_branch
    %11 = sbr.rel (0) target = $region9
  $region8: #{forward.15} parent=0 // pred_region
    _
  $region9: #{forward.15} parent=0 // pred_fallthru
    _
  // Predicated region
  $region10: #{forward.15} parent=0 // pred_check
    _
  $region11: #{forward.15} parent=0 // pred_check_branch
    %13 = sbr.rel (0) target = $region13
  $region12: #{forward.15} parent=0 // pred_region
    _
  $region13: #{forward.15} parent=0 // pred_fallthru
    _
  %p14 = scmp.eq.s32.totalorder 0, 0
  // Predicated region
  $region14: #{forward.15} parent=0 // pred_check
    %p15 = pneg %p14
  $region15: #{forward.15} parent=0 // pred_check_branch
    %17 = sbr.rel (%p15) target = $region17
  $region16: #{forward.15} parent=0 // pred_region
    %vm18 = vcmask 261120
    %19 = vst.msk [vmem:[#allocation2] sm:$0xff] %vm18, 0.0
  $region17: #{forward.15} parent=0 // pred_fallthru
    _
  %v20 = vld [vmem:[#allocation2] sm:$0xff]
  %v21 = vld [vmem:[%s0] sm:$0xff]
  %v22 = vld [vmem:[%s1] sm:$0xff]
  %v23 = vld [vmem:[%s1 + $0x8] sm:$0xff]
  %v24 = vld [vmem:[%s1 + $0x10] sm:$0xff]
  %v25 = vld [vmem:[%s1 + $0x18] sm:$0xff]
  %v26 = vld [vmem:[%s1 + $0x20] sm:$0xff]
  %v27 = vld [vmem:[%s1 + $0x28] sm:$0xff]
  %v28 = vld [vmem:[%s1 + $0x30] sm:$0xff]
  %v29 = vld [vmem:[%s1 + $0x38] sm:$0xff]
  %v30 = vld [vmem:[%s1 + $0x40] sm:$0xff]
  %v31 = vld [vmem:[%s1 + $0x48] sm:$0xff]
  %v32 = vld [vmem:[%s1 + $0x50] sm:$0xff]
  %v33 = vld [vmem:[%s1 + $0x58] sm:$0xff]
  %v34 = vld [vmem:[%s1 + $0x60] sm:$0xff]
  %v35 = vld [vmem:[%s1 + $0x68] sm:$0xff]
  %v36 = vld [vmem:[%s1 + $0x70] sm:$0xff]
  %v37 = vld [vmem:[%s1 + $0x78] sm:$0xff]
  %38 = vmatpush.msra.mxu0 %v37
  %39 = vmatpush.msra.mxu0 %v36
  %40 = vmatpush.msra.mxu0 %v35
  %41 = vmatpush.msra.mxu0 %v34
  %42 = vmatpush.msra.mxu0 %v33
  %43 = vmatpush.msra.mxu0 %v32
  %44 = vmatpush.msra.mxu0 %v31
  %45 = vmatpush.msra.mxu0 %v30
  %46 = vmatpush.msra.mxu0 %v29
  %47 = vmatpush.msra.mxu0 %v28
  %48 = vmatpush.msra.mxu0 %v27
  %49 = vmatpush.msra.mxu0 %v26
  %50 = vmatpush.msra.mxu0 %v25
  %51 = vmatpush.msra.mxu0 %v24
  %52 = vmatpush.msra.mxu0 %v23
  %53 = vmatpush.msra.mxu0 %v22
  %54 = vmatmul.f32.gmra.mxu0 %v21
  %v55 = vpop.f32.mrf.mxu0
  %v56 = vadd.f32 0.0, %v55
  %57 = vdwg.mxu0
  %v58 = vadd.f32 %v20, %v56
  %vm59 = vcmask 261120
  %60 = vst.msk [vmem:[#allocation2] sm:$0xff] %vm59, %v58
  // Predicated region
  $region18: #{forward.15} parent=0 // pred_check
    %p61 = pneg %p14
  $region19: #{forward.15} parent=0 // pred_check_branch
    %63 = sbr.rel (%p61) target = $region21
  $region20: #{forward.15} parent=0 // pred_region
    %v64 = vld [vmem:[#allocation2] sm:$0xff]
    %v65 = vld [vmem:[%s2] sm:$0x1]
    %v67 = vperm.slane %v65, 0
    %v69 = vadd.f32 %v64, %v67
    %v70 = vmax.f32 %v69, 0.0
    %71 = vst.msk [vmem:[%s3] sm:$0xff] %vm59, %v70
  $region21: #{forward.15} parent=0 // pred_fallthru
    _
  // Predicated region
  $region22: #{forward.15} parent=0 // pred_check
    _
  $region23: #{forward.15} parent=0 // pred_check_branch
    %73 = sbr.rel (0) target = $region25
  $region24: #{forward.15} parent=0 // pred_region
    _
  $region25: #{forward.15} parent=0 // pred_fallthru
    _
  // Predicated region
  $region26: #{forward.15} parent=0 // pred_check
    _
  $region27: #{forward.15} parent=0 // pred_check_branch
    %75 = sbr.rel (0) target = $region29
  $region28: #{forward.15} parent=0 // pred_region
    _
  $region29: #{forward.15} parent=0 // pred_fallthru
    _

// kernel: forward.16
$region0: #{forward.16}
  #allocation0 [shape = 'u32[]', space=smem, size = 0x4, offset = 0x4, fixed_abs, tag = 'smem constant byte address 0x4 - core index']
  #allocation1 [shape = 'u32[72,128]{1,0:T(1,128)}', space=vmem, size = 0x9000, scoped, tag = 'internal scratch']
  #allocation2 [shape = 'f32[8,128]{1,0:T(8,128)}', space=vmem, size = 0x1000, scoped, tag = 'scratch operand']
  %s0 = inlined_call_operand.vmem [shape: f32[8,32], index: 0, kind: input, shape index: {}]
  %s1 = inlined_call_operand.vmem [shape: f32[32,128], index: 1, kind: input, shape index: {}]
  %s2 = inlined_call_operand.vmem [shape: f32[1,128], index: 2, kind: input, shape index: {}]
  %s3 = inlined_call_operand.vmem [shape: f32[8,128], index: 3, kind: output, shape index: {}]
  %s4 = sld [smem:[#allocation0]]
  $region30: #{forward.16} parent=0
    _
  %s6 = ssub.s32 1, %s4
  %s7 = scalar_select 0, %s6, %s4
  // Predicated region
  $region2: #{forward.16} parent=0 // pred_check
    _
  $region3: #{forward.16} parent=0 // pred_check_branch
    %9 = sbr.rel (0) target = $region5
  $region4: #{forward.16} parent=0 // pred_region
    _
  $region5: #{forward.16} parent=0 // pred_fallthru
    _
  // Predicated region
  $region6: #{forward.16} parent=0 // pred_check
    _
  $region7: #{forward.16} parent=0 // pred_check_branch
    %11 = sbr.rel (0) target = $region9
  $region8: #{forward.16} parent=0 // pred_region
    _
  $region9: #{forward.16} parent=0 // pred_fallthru
    _
  // Predicated region
  $region10: #{forward.16} parent=0 // pred_check
    _
  $region11: #{forward.16} parent=0 // pred_check_branch
    %13 = sbr.rel (0) target = $region13
  $region12: #{forward.16} parent=0 // pred_region
    _
  $region13: #{forward.16} parent=0 // pred_fallthru
    _
  %p14 = scmp.eq.s32.totalorder 0, 0
  // Predicated region
  $region14: #{forward.16} parent=0 // pred_check
    %p15 = pneg %p14
  $region15: #{forward.16} parent=0 // pred_check_branch
    %17 = sbr.rel (%p15) target = $region17
  $region16: #{forward.16} parent=0 // pred_region
    %18 = vst [vmem:[#allocation2] sm:$0xff] 0.0
  $region17: #{forward.16} parent=0 // pred_fallthru
    _
  %v19 = vld [vmem:[#allocation2] sm:$0xff]
  %v20 = vld [vmem:[%s0] sm:$0xff]
  %v21 = vld [vmem:[%s1] sm:$0xff]
  %v22 = vld [vmem:[%s1 + $0x8] sm:$0xff]
  %v23 = vld [vmem:[%s1 + $0x10] sm:$0xff]
  %v24 = vld [vmem:[%s1 + $0x18] sm:$0xff]
  %vm25 = vcmask 261120
  %v27 = vsel %vm25, %v20, 0
  %29 = vmatpush.msra.mxu0 0.0
  %30 = vmatpush.msra.mxu0 0.0
  %31 = vmatpush.msra.mxu0 0.0
  %32 = vmatpush.msra.mxu0 0.0
  %33 = vmatpush.msra.mxu0 0.0
  %34 = vmatpush.msra.mxu0 0.0
  %35 = vmatpush.msra.mxu0 0.0
  %36 = vmatpush.msra.mxu0 0.0
  %37 = vmatpush.msra.mxu0 0.0
  %38 = vmatpush.msra.mxu0 0.0
  %39 = vmatpush.msra.mxu0 0.0
  %40 = vmatpush.msra.mxu0 0.0
  %41 = vmatpush.msra.mxu0 %v24
  %42 = vmatpush.msra.mxu0 %v23
  %43 = vmatpush.msra.mxu0 %v22
  %44 = vmatpush.msra.mxu0 %v21
  %45 = vmatmul.f32.gmra.mxu0 %v27
  %v46 = vpop.f32.mrf.mxu0
  %v47 = vadd.f32 0.0, %v46
  %48 = vdwg.mxu0
  %v49 = vadd.f32 %v19, %v47
  %50 = vst [vmem:[#allocation2] sm:$0xff] %v49
  // Predicated region
  $region18: #{forward.16} parent=0 // pred_check
    %p51 = pneg %p14
  $region19: #{forward.16} parent=0 // pred_check_branch
    %53 = sbr.rel (%p51) target = $region21
  $region20: #{forward.16} parent=0 // pred_region
    %v54 = vld [vmem:[#allocation2] sm:$0xff]
    %v55 = vld [vmem:[%s2] sm:$0x1]
    %v57 = vperm.slane %v55, 0
    %v59 = vadd.f32 %v54, %v57
    %60 = vst [vmem:[%s3] sm:$0xff] %v59
  $region21: #{forward.16} parent=0 // pred_fallthru
    _
  // Predicated region
  $region22: #{forward.16} parent=0 // pred_check
    _
  $region23: #{forward.16} parent=0 // pred_check_branch
    %62 = sbr.rel (0) target = $region25
  $region24: #{forward.16} parent=0 // pred_region
    _
  $region25: #{forward.16} parent=0 // pred_fallthru
    _
  // Predicated region
  $region26: #{forward.16} parent=0 // pred_check
    _
  $region27: #{forward.16} parent=0 // pred_check_branch
    %64 = sbr.rel (0) target = $region29
  $region28: #{forward.16} parent=0 // pred_region
    _
  $region29: #{forward.16} parent=0 // pred_fallthru
    _

// kernel: forward.17
$region0: #{forward.17}
  #allocation0 [shape = 'u32[]', space=smem, size = 0x4, offset = 0x4, fixed_abs, tag = 'smem constant byte address 0x4 - core index']
  #allocation1 [shape = 'u32[72,128]{1,0:T(1,128)}', space=vmem, size = 0x9000, scoped, tag = 'internal scratch']
  %s0 = inlined_call_operand.vmem [shape: f32[3,2,128], index: 0, kind: input, shape index: {}]
  %s1 = inlined_call_operand.vmem [shape: f32[32,128], index: 1, kind: input, shape index: {}]
  %s2 = inlined_call_operand.vmem [shape: f32[3,2,32], index: 2, kind: output, shape index: {}]
  %s3 = sld [smem:[#allocation0]]
  $region25: #{forward.17} parent=0
    _
  %s5 = ssub.s32 1, %s3
  %s6 = scalar_select 0, %s5, %s3
  // Predicated region
  $region2: #{forward.17} parent=0 // pred_check
    _
  $region3: #{forward.17} parent=0 // pred_check_branch
    %8 = sbr.rel (0) target = $region5
  $region4: #{forward.17} parent=0 // pred_region
    _
  $region5: #{forward.17} parent=0 // pred_fallthru
    _
  // Predicated region
  $region6: #{forward.17} parent=0 // pred_check
    _
  $region7: #{forward.17} parent=0 // pred_check_branch
    %10 = sbr.rel (0) target = $region9
  $region8: #{forward.17} parent=0 // pred_region
    _
  $region9: #{forward.17} parent=0 // pred_fallthru
    _
  %v11 = vld [vmem:[%s1] sm:$0xff]
  %v12 = vld [vmem:[%s1 + $0x8] sm:$0xff]
  %v13 = vld [vmem:[%s1 + $0x10] sm:$0xff]
  %v14 = vld [vmem:[%s1 + $0x18] sm:$0xff]
  loop: start=0, step=1, limit=3
  $region10: #{forward.17} parent=0 // loop_pre_header
    _
  $region11: #{forward.17} parent=0 // loop_header
    %s16 = sphi 0, %s20
    %p17 = scmp.ge.s32.totalorder %s16, 3
    %v21 = vphi 0.0, %v89
    %v22 = vphi 0.0, %v83
  $region12: #{forward.17} parent=0 // loop_header_branch
    %19 = sbr.rel (%p17) target = $region16
  $region13: #{forward.17} parent=0 // loop_body
    %s23 = smul.u32 %s16, 2
    %s24 = scalar_lea.vmem %s0, %s23
    %v25 = vld [vmem:[%s24] sm:$0x3]
    %27 = vrot.lane.b32.xlu0 %v21, 32
    %v28 = vpop.permute.xlu0 %27
    %vm29 = vcmask 261120
    %v30 = vsel %vm29, %v28, 0
    %32 = vmatpush.msra.mxu0 0.0
    %33 = vmatpush.msra.mxu0 0.0
    %34 = vmatpush.msra.mxu0 0.0
    %35 = vmatpush.msra.mxu0 0.0
    %36 = vmatpush.msra.mxu0 0.0
    %37 = vmatpush.msra.mxu0 0.0
    %38 = vmatpush.msra.mxu0 0.0
    %39 = vmatpush.msra.mxu0 0.0
    %40 = vmatpush.msra.mxu0 0.0
    %41 = vmatpush.msra.mxu0 0.0
    %42 = vmatpush.msra.mxu0 0.0
    %43 = vmatpush.msra.mxu0 0.0
    %44 = vmatpush.msra.mxu0 %v14
    %45 = vmatpush.msra.mxu0 %v13
    %46 = vmatpush.msra.mxu0 %v12
    %47 = vmatpush.msra.mxu0 %v11
    %48 = vmatmul.f32.gmra.mxu0 %v30
    %v49 = vpop.f32.mrf.mxu0
    %v50 = vadd.f32 0.0, %v49
    %51 = vdwg.mxu0
    %v52 = vadd.f32 %v25, %v50
    %v53 = vxor.u32 %v52, 2147483648
    %v54 = vmul.f32 %v53, 1.442695
    %v55 = vpow.pop %v54
    %v56 = vadd.f32 %v55, 1.0
    %v57 = vrcp.pop %v56
    %v58 = vmul.f32 %v56, %v57
    %v59 = vsub.f32 1.0, %v58
    %v60 = vmul.f32 %v57, %v59
    %v61 = vadd.f32 %v57, %v60
    %vm62 = vweird.f32 %v56
    %vm63 = vweird.f32 %v57
    %vm64 = vmor %vm62, %vm63
    %v65 = vsel %vm64, %v57, %v61
    %v66 = vand.u32 2147483647, %v56
    %vm67 = vcmp.eq.f32.partialorder %v66, 8.507059e+37
    %v68 = vand.u32 %v56, 2147483648
    %v69 = vor.u32 1.1754944e-38, %v68
    %v70 = vsel %vm67, %v69, %v65
    %v71 = vmul.f32 1.0, %v70
    %v72 = vtanh.pop %v52
    %v73 = vmul.f32 %v71, %v22
    %75 = vrot.lane.b32.xlu0 %v72, 64
    %v76 = vpop.permute.xlu0 %75
    %v78 = vmul.f32 %v71, %v76
    %80 = vrot.lane.b32.xlu0 %v78, 32
    %v81 = vpop.permute.xlu0 %80
    %v83 = vadd.f32 %v73, %v81
    %v84 = vtanh.pop %v83
    %86 = vrot.lane.b32.xlu0 %v84, 64
    %v87 = vpop.permute.xlu0 %86
    %v89 = vmul.f32 %v71, %v87
    %91 = vrot.lane.b32.xlu0 %v89, 32
    %v92 = vpop.permute.xlu0 %91
    %s94 = scalar_lea.vmem %s2, %s23
    %vm95 = vcmask 254976
    %96 = vst.msk [vmem:[%s94] sm:$0x3] %vm95, %v92
  $region14: #{forward.17} parent=0 // loop_footer
    %s20 = sadd.s32 1, %s16
  $region15: #{forward.17} parent=0 // loop_footer_branch
    %15 = sbr.rel target = $region11
  $region16: #{forward.17} parent=0 // loop_exit
    _
  // Predicated region
  $region17: #{forward.17} parent=0 // pred_check
    _
  $region18: #{forward.17} parent=0 // pred_check_branch
    %98 = sbr.rel (0) target = $region20
  $region19: #{forward.17} parent=0 // pred_region
    _
  $region20: #{forward.17} parent=0 // pred_fallthru
    _
  // Predicated region
  $region21: #{forward.17} parent=0 // pred_check
    _
  $region22: #{forward.17} parent=0 // pred_check_branch
    %100 = sbr.rel (0) target = $region24
  $region23: #{forward.17} parent=0 // pred_region
    _
  $region24: #{forward.17} parent=0 // pred_fallthru
    _

// kernel: forward.21
$region0: #{forward.21}
  #allocation0 [shape = 'u32[]', space=smem, size = 0x4, offset = 0x4, fixed_abs, tag = 'smem constant byte address 0x4 - core index']
  #allocation1 [shape = 'u32[72,128]{1,0:T(1,128)}', space=vmem, size = 0x9000, scoped, tag = 'internal scratch']
  %s0 = inlined_call_operand.vmem [shape: f32[2,16,16], index: 0, kind: input, shape index: {}]
  %s1 = inlined_call_operand.vmem [shape: f32[1,16,1], index: 1, kind: input, shape index: {}]
  %s2 = inlined_call_operand.vmem [shape: f32[2,16,16], index: 2, kind: output, shape index: {}]
  %s3 = sld [smem:[#allocation0]]
  $region18: #{forward.21} parent=0
    _
  %s5 = ssub.s32 1, %s3
  %s6 = scalar_select 0, %s5, %s3
  // Predicated region
  $region2: #{forward.21} parent=0 // pred_check
    _
  $region3: #{forward.21} parent=0 // pred_check_branch
    %8 = sbr.rel (0) target = $region5
  $region4: #{forward.21} parent=0 // pred_region
    _
  $region5: #{forward.21} parent=0 // pred_fallthru
    _
  // Predicated region
  $region6: #{forward.21} parent=0 // pred_check
    _
  $region7: #{forward.21} parent=0 // pred_check_branch
    %10 = sbr.rel (0) target = $region9
  $region8: #{forward.21} parent=0 // pred_region
    _
  $region9: #{forward.21} parent=0 // pred_fallthru
    _
  %v11 = vld [vmem:[%s0] sm:$0xff]
  %v12 = vld [vmem:[%s0 + $0x8] sm:$0xff]
  %v13 = vld [vmem:[%s0 + $0x10] sm:$0xff]
  %v14 = vld [vmem:[%s0 + $0x18] sm:$0xff]
  %v15 = vld [vmem:[%s1] sm:$0xff]
  %v16 = vld [vmem:[%s1 + $0x8] sm:$0xff]
  %18 = vset.pattern.permute.xlu0 0
  %19 = vperm.xlu0 %18, %v15
  %v20 = vpop.permute.xlu0 %19
  %23 = vset.pattern.permute.xlu0 0
  %24 = vperm.xlu0 %23, %v16
  %v25 = vpop.permute.xlu0 %24
  %v27 = vadd.f32 %v11, %v20
  %v28 = vadd.f32 %v12, %v25
  %v29 = vadd.f32 %v13, %v20
  %v30 = vadd.f32 %v14, %v25
  %v31 = vmax.f32 %v27, 0.0
  %v32 = vmax.f32 %v28, 0.0
  %v33 = vmax.f32 %v29, 0.0
  %v34 = vmax.f32 %v30, 0.0
  %vm35 = vcmask 130048
  %36 = vst.msk [vmem:[%s2] sm:$0xff] %vm35, %v31
  %37 = vst.msk [vmem:[%s2 + $0x8] sm:$0xff] %vm35, %v32
  %38 = vst.msk [vmem:[%s2 + $0x10] sm:$0xff] %vm35, %v33
  %39 = vst.msk [vmem:[%s2 + $0x18] sm:$0xff] %vm35, %v34
  // Predicated region
  $region10: #{forward.21} parent=0 // pred_check
    _
  $region11: #{forward.21} parent=0 // pred_check_branch
    %41 = sbr.rel (0) target = $region13
  $region12: #{forward.21} parent=0 // pred_region
    _
  $region13: #{forward.21} parent=0 // pred_fallthru
    _
  // Predicated region
  $region14: #{forward.21} parent=0 // pred_check
    _
  $region15: #{forward.21} parent=0 // pred_check_branch
    %43 = sbr.rel (0) target = $region17
  $region16: #{forward.21} parent=0 // pred_region
    _
  $region17: #{forward.21} parent=0 // pred_fallthru
    _

// kernel: forward.22
$region0: #{forward.22}
  #allocation0 [shape = 'u32[]', space=smem, size = 0x4, offset = 0x4, fixed_abs, tag = 'smem constant byte address 0x4 - core index']
  #allocation1 [shape = 'u32[72,128]{1,0:T(1,128)}', space=vmem, size = 0x9000, scoped, tag = 'internal scratch']
  #allocation2 [shape = 'f32[32,8]{1,0:T(8,128)}', space=vmem, size = 0x4000, scoped, tag = 'scratch operand']
  %s0 = inlined_call_operand.vmem [shape: f32[32,16], index: 0, kind: input, shape index: {}]
  %s1 = inlined_call_operand.vmem [shape: f32[16,8], index: 1, kind: input, shape index: {}]
  %s2 = inlined_call_operand.vmem [shape: f32[1,8], index: 2, kind: input, shape index: {}]
  %s3 = inlined_call_operand.vmem [shape: f32[32,8], index: 3, kind: output, shape index: {}]
  %s4 = sld [smem:[#allocation0]]
  $region30: #{forward.22} parent=0
    _
  %s6 = ssub.s32 1, %s4
  %s7 = scalar_select 0, %s6, %s4
  // Predicated region
  $region2: #{forward.22} parent=0 // pred_check
    _
  $region3: #{forward.22} parent=0 // pred_check_branch
    %9 = sbr.rel (0) target = $region5
  $region4: #{forward.22} parent=0 // pred_region
    _
  $region5: #{forward.22} parent=0 // pred_fallthru
    _
  // Predicated region
  $region6: #{forward.22} parent=0 // pred_check
    _
  $region7: #{forward.22} parent=0 // pred_check_branch
    %11 = sbr.rel (0) target = $region9
  $region8: #{forward.22} parent=0 // pred_region
    _
  $region9: #{forward.22} parent=0 // pred_fallthru
    _
  // Predicated region
  $region10: #{forward.22} parent=0 // pred_check
    _
  $region11: #{forward.22} parent=0 // pred_check_branch
    %13 = sbr.rel (0) target = $region13
  $region12: #{forward.22} parent=0 // pred_region
    _
  $region13: #{forward.22} parent=0 // pred_fallthru
    _
  %p14 = scmp.eq.s32.totalorder 0, 0
  // Predicated region
  $region14: #{forward.22} parent=0 // pred_check
    %p15 = pneg %p14
  $region15: #{forward.22} parent=0 // pred_check_branch
    %17 = sbr.rel (%p15) target = $region17
  $region16: #{forward.22} parent=0 // pred_region
    %vm18 = vcmask 64512
    %19 = vst.msk [vmem:[#allocation2] sm:$0xff] %vm18, 0.0
    %20 = vst.msk [vmem:[#allocation2 + $0x8] sm:$0xff] %vm18, 0.0
    %21 = vst.msk [vmem:[#allocation2 + $0x10] sm:$0xff] %vm18, 0.0
    %22 = vst.msk [vmem:[#allocation2 + $0x18] sm:$0xff] %vm18, 0.0
  $region17: #{forward.22} parent=0 // pred_fallthru
    _
  %v23 = vld [vmem:[#allocation2] sm:$0xff]
  %v24 = vld [vmem:[#allocation2 + $0x8] sm:$0xff]
  %v25 = vld [vmem:[#allocation2 + $0x10] sm:$0xff]
  %v26 = vld [vmem:[#allocation2 + $0x18] sm:$0xff]
  %v27 = vld [vmem:[%s0] sm:$0xff]
  %v28 = vld [vmem:[%s0 + $0x8] sm:$0xff]
  %v29 = vld [vmem:[%s0 + $0x10] sm:$0xff]
  %v30 = vld [vmem:[%s0 + $0x18] sm:$0xff]
  %v31 = vld [vmem:[%s1] sm:$0xff]
  %v32 = vld [vmem:[%s1 + $0x8] sm:$0xff]
  %vm33 = vcmask 130048
  %v35 = vsel %vm33, %v27, 0
  %v38 = vsel %vm33, %v28, 0
  %v41 = vsel %vm33, %v29, 0
  %v44 = vsel %vm33, %v30, 0
  %46 = vmatpush.msra.mxu0 0.0
  %47 = vmatpush.msra.mxu0 0.0
  %48 = vmatpush.msra.mxu0 0.0
  %49 = vmatpush.msra.mxu0 0.0
  %50 = vmatpush.msra.mxu0 0.0
  %51 = vmatpush.msra.mxu0 0.0
  %52 = vmatpush.msra.mxu0 0.0
  %53 = vmatpush.msra.mxu0 0.0
  %54 = vmatpush.msra.mxu0 0.0
  %55 = vmatpush.msra.mxu0 0.0
  %56 = vmatpush.msra.mxu0 0.0
  %57 = vmatpush.msra.mxu0 0.0
  %58 = vmatpush.msra.mxu0 0.0
  %59 = vmatpush.msra.mxu0 0.0
  %60 = vmatpush.msra.mxu0 %v32
  %61 = vmatpush.msra.mxu0 %v31
  %62 = vmatmul.f32.gmra.mxu0 %v35
  %v63 = vpop.f32.mrf.mxu0
  %v64 = vadd.f32 0.0, %v63
  %65 = vmatmul.f32.gmra.mxu0 %v38
  %v66 = vpop.f32.mrf.mxu0
  %v67 = vadd.f32 0.0, %v66
  %68 = vmatmul.f32.gmra.mxu0 %v41
  %v69 = vpop.f32.mrf.mxu0
  %v70 = vadd.f32 0.0, %v69
  %71 = vmatmul.f32.gmra.mxu0 %v44
  %v72 = vpop.f32.mrf.mxu0
  %v73 = vadd.f32 0.0, %v72
  %74 = vdwg.mxu0
  %v75 = vadd.f32 %v23, %v64
  %v76 = vadd.f32 %v24, %v67
  %v77 = vadd.f32 %v25, %v70
  %v78 = vadd.f32 %v26, %v73
  %vm79 = vcmask 64512
  %80 = vst.msk [vmem:[#allocation2] sm:$0xff] %vm79, %v75
  %81 = vst.msk [vmem:[#allocation2 + $0x8] sm:$0xff] %vm79, %v76
  %82 = vst.msk [vmem:[#allocation2 + $0x10] sm:$0xff] %vm79, %v77
  %83 = vst.msk [vmem:[#allocation2 + $0x18] sm:$0xff] %vm79, %v78
  // Predicated region
  $region18: #{forward.22} parent=0 // pred_check
    %p84 = pneg %p14
  $region19: #{forward.22} parent=0 // pred_check_branch
    %86 = sbr.rel (%p84) target = $region21
  $region20: #{forward.22} parent=0 // pred_region
    %v87 = vld [vmem:[#allocation2] sm:$0xff]
    %v88 = vld [vmem:[#allocation2 + $0x8] sm:$0xff]
    %v89 = vld [vmem:[#allocation2 + $0x10] sm:$0xff]
    %v90 = vld [vmem:[#allocation2 + $0x18] sm:$0xff]
    %v91 = vld [vmem:[%s2] sm:$0x1]
    %v93 = vperm.slane %v91, 0
    %v95 = vadd.f32 %v87, %v93
    %v96 = vadd.f32 %v88, %v93
    %v97 = vadd.f32 %v89, %v93
    %v98 = vadd.f32 %v90, %v93
    %99 = vst.msk [vmem:[%s3] sm:$0xff] %vm79, %v95
    %100 = vst.msk [vmem:[%s3 + $0x8] sm:$0xff] %vm79, %v96
    %101 = vst.msk [vmem:[%s3 + $0x10] sm:$0xff] %vm79, %v97
    %102 = vst.msk [vmem:[%s3 + $0x18] sm:$0xff] %vm79, %v98
  $region21: #{forward.22} parent=0 // pred_fallthru
    _
  // Predicated region
  $region22: #{forward.22} parent=0 // pred_check
    _
  $region23: #{forward.22} parent=0 // pred_check_branch
    %104 = sbr.rel (0) target = $region25
  $region24: #{forward.22} parent=0 // pred_region
    _
  $region25: #{forward.22} parent=0 // pred_fallthru
    _
  // Predicated region
  $region26: #{forward.22} parent=0 // pred_check
    _
  $region27: #{forward.22} parent=0 // pred_check_branch
    %106 = sbr.rel (0) target = $region29
  $region28: #{forward.22} parent=0 // pred_region
    _
  $region29: #{forward.22} parent=0 // pred_fallthru
    _

// kernel: forward.23
$region0: #{forward.23}
  #allocation0 [shape = 'u32[]', space=smem, size = 0x4, offset = 0x4, fixed_abs, tag = 'smem constant byte address 0x4 - core index']
  #allocation1 [shape = 'u32[72,128]{1,0:T(1,128)}', space=vmem, size = 0x9000, scoped, tag = 'internal scratch']
  #allocation2 [shape = 'f32[1,1,1]{2,1,0:T(1,128)S(1)}', space=vmem, size = 0x200, scoped, tag = 'scoped memory for forward.23']
  %s0 = inlined_call_operand.vmem [shape: f32[2,1,68], index: 0, kind: input, shape index: {}]
  %s1 = inlined_call_operand.<no memory space> [shape: f32[1,1,1], index: 1, kind: input, shape index: {}]
  %s2 = inlined_call_operand.vmem [shape: f32[2,1,1], index: 2, kind: input, shape index: {}]
  %s3 = inlined_call_operand.hbm [shape: f32[2,1,68], index: 3, kind: output, shape index: {}]
  %s4 = sld [smem:[#allocation0]]
  $region22: #{forward.23} parent=0
    _
  %s6 = ssub.s32 1, %s4
  %s7 = scalar_select 0, %s6, %s4
  %v8 = vstv %s1
  %9 = vst [vmem:[#allocation2] sm:$0x1] %v8
  $region1: #{forward.23} parent=0
    #allocation3 [shape = 'u8[1024]{0}', space=vmem, size = 0x400, scoped, tag = 'output window, operand 0, single buffered']
    #allocation4 [shape = 's32[1]{0}', space=sflag, size = 0x4, scoped, tag = 'scoped memory for forward.23']
    %10 = vsyncpa [#allocation4], 0
    // Predicated region
    $region2: #{forward.23} parent=1 // pred_check
      _
    $region3: #{forward.23} parent=1 // pred_check_branch
      %12 = sbr.rel (0) target = $region5
    $region4: #{forward.23} parent=1 // pred_region
      _
    $region5: #{forward.23} parent=1 // pred_fallthru
      _
    // Predicated region
    $region6: #{forward.23} parent=1 // pred_check
      _
    $region7: #{forward.23} parent=1 // pred_check_branch
      %14 = sbr.rel (0) target = $region9
    $region8: #{forward.23} parent=1 // pred_region
      _
    $region9: #{forward.23} parent=1 // pred_fallthru
      _
    // Predicated region
    $region10: #{forward.23} parent=1 // pred_check
      _
    $region11: #{forward.23} parent=1 // pred_check_branch
      %16 = sbr.rel (0) target = $region13
    $region12: #{forward.23} parent=1 // pred_region
      _
    $region13: #{forward.23} parent=1 // pred_fallthru
      _
    %v17 = vld [vmem:[%s0] sm:$0x1]
    %v18 = vld [vmem:[%s0 + $0x1] sm:$0x1]
    %v19 = vld [vmem:[#allocation2] sm:$0x1]
    %21 = vset.pattern.permute.xlu0 0
    %22 = vperm.xlu0 %21, %v19
    %v23 = vpop.permute.xlu0 %22
    %v25 = vperm.slane %v23, 0
    %v26 = vadd.f32 %v17, %v25
    %v27 = vadd.f32 %v18, %v25
    %v28 = vld [vmem:[%s2] sm:$0x1]
    %v29 = vld [vmem:[%s2 + $0x1] sm:$0x1]
    %31 = vset.pattern.permute.xlu0 0
    %32 = vperm.xlu0 %31, %v28
    %v33 = vpop.permute.xlu0 %32
    %v35 = vperm.slane %v33, 0
    %37 = vset.pattern.permute.xlu0 0
    %38 = vperm.xlu0 %37, %v29
    %v39 = vpop.permute.xlu0 %38
    %v41 = vperm.slane %v39, 0
    %v42 = vmul.f32 %v26, %v35
    %v43 = vmul.f32 %v27, %v41
    %vm44 = vcmask 548864
    %45 = vst.msk [vmem:[#allocation3] sm:$0x1] %vm44, %v42
    %46 = vst.msk [vmem:[#allocation3 + $0x1] sm:$0x1] %vm44, %v43
    // Predicated region
    $region14: #{forward.23} parent=1 // pred_check
      _
    $region15: #{forward.23} parent=1 // pred_check_branch
      %48 = sbr.rel (0) target = $region17
    $region16: #{forward.23} parent=1 // pred_region
      %50 = vsyncadd [#allocation4], 0
      %s51 = sshll.u32 [#allocation3], 4
      %s52 = int_to_ptr.vmem [resolvable:$true] %s51
      %s53 = sshll.u32 %s3, 4
      %s54 = int_to_ptr.hbm [resolvable:$true] %s53
      %59 = dma.vmem_to_hbm [thread:$0]  %s52, 32, %s54, [#allocation4], 16, 16, 1
    $region17: #{forward.23} parent=1 // pred_fallthru
      _
    // Predicated region
    $region18: #{forward.23} parent=1 // pred_check
      _
    $region19: #{forward.23} parent=1 // pred_check_branch
      %61 = sbr.rel (0) target = $region21
    $region20: #{forward.23} parent=1 // pred_region
      %63 = dma.done [#allocation4], 32
    $region21: #{forward.23} parent=1 // pred_fallthru
      _
    %64 = vsyncpa [#allocation4], 1

</llo_original>
